<compile_context>
chip_gen: v5e
topology: v5e:2x2
jax: 0.10.0
libtpu: 0.0.40
codegen_flags: <defaults>
</compile_context>

<pallas_src>
import functools

import jax
import jax.numpy as jnp
from jax.experimental import pallas as pl
from jax.experimental.pallas import tpu as pltpu

_LANE = 128
_PAD_MODE = {"zero": "constant", "reflect": "reflect", "replicate": "edge"}
_TILE_VMEM_BUDGET = 24 * 1024 * 1024  # per-step activation budget (v7x-safe)


def _round_up(x, m):
    return (x + m - 1) // m * m


def _tile_footprint_bytes(th, W, Cp):
    """Rough per-grid-step VMEM footprint for a row tile of height th."""
    f32, bf16 = 4, 2
    inp = 2 * (th + 4) * (W + 2) * Cp * f32          # double-buffered input block
    out = 2 * th * W * Cp * f32                      # double-buffered output block
    slabs = ((th + 4) + (th + 2)) * W * 3 * Cp * bf16  # K-folded lhs slabs
    inter = 3 * (th + 2) * (W + 2) * Cp * f32        # acc / y1 / y1-padded
    return inp + out + slabs + inter


def _pick_tile_h(H, W, Cp):
    """Largest divisor of H that fits the VMEM budget, preferring >=2 tiles
    per image (pipelining) and tiles of at least 8 rows (per-step overhead)."""
    divs = [d for d in range(1, H + 1) if H % d == 0]
    fitting = [d for d in divs if _tile_footprint_bytes(d, W, Cp) <= _TILE_VMEM_BUDGET]
    if not fitting:
        fitting = [min(divs)]
    preferred = [d for d in fitting if H // d >= 2 and d >= min(8, H)]
    pool = preferred or fitting
    return max(pool)


def _vmem_limit_bytes():
    """Generation-aware VMEM limit: ~3/4 of physical capacity."""
    try:
        cap = int(pltpu.get_tpu_info().vmem_capacity_bytes)
    except Exception:
        cap = 64 * 1024 * 1024  # conservative fallback (v7x-sized)
    return max(32 * 1024 * 1024, (cap * 3) // 4)


def _make_resnet_block_kernel(tile_h, W, Cp, padding_type):
    """Fused (pad->conv->ReLU->pad->conv) + residual kernel for one row tile.

    Input block layout (f32): (tile_h + 4, W + 2, Cp)
      rows: [2-row top halo | tile_h rows | 2-row bottom halo] of the
            spatially pre-padded image (dummy rows at image boundaries),
      cols: 1-pixel pre-pad for conv1, channels zero-padded to Cp.
    """
    m2 = tile_h * W

    def pad_cols(v):
        # 1-pixel column pad with the module's mode (applied to y1 for conv2).
        rows = v.shape[0]
        if padding_type == "zero":
            left = jnp.zeros((rows, 1, Cp), v.dtype)
            right = left
        elif padding_type == "reflect":
            left, right = v[:, 1:2, :], v[:, W - 2:W - 1, :]
        else:  # replicate
            left, right = v[:, 0:1, :], v[:, W - 1:W, :]
        return jnp.concatenate([left, v, right], axis=1)

    def folded_slab(vp):
        # vp: (rows, W+2, Cp) -> (rows, W, 3*Cp): kw taps folded into K/lanes.
        return jnp.concatenate(
            [vp[:, 0:W, :], vp[:, 1:W + 1, :], vp[:, 2:W + 2, :]], axis=-1)

    def conv3x3(slab, rows_out, w_ref, b_ref):
        # slab: (rows_out + 2, W, 3*Cp) bf16; w_ref: (3, 3*Cp, Cp) bf16.
        # 3 MXU matmuls with K = 3*Cp; accumulator initialized with the bias.
        m = rows_out * W
        flat = slab.reshape(slab.shape[0] * W, 3 * Cp)
        acc = jnp.broadcast_to(b_ref[...], (m, Cp))   # bias-folded init (f32)
        for kh in range(3):
            acc = acc + jnp.dot(flat[kh * W:kh * W + m], w_ref[kh],
                                preferred_element_type=jnp.float32)
        return acc

    def kernel(x_ref, w1_ref, b1_ref, w2_ref, b2_ref, o_ref):
        r = pl.program_id(1)
        num_r = pl.num_programs(1)

        xt = x_ref[0]                                  # (tile_h+4, W+2, Cp) f32
        xb = xt.astype(jnp.bfloat16)

        # conv1 over the tile plus one halo row above/below (tile_h + 2 rows).
        y1 = conv3x3(folded_slab(xb), tile_h + 2, w1_ref, b1_ref)
        y1 = jnp.maximum(y1, 0.0).reshape(tile_h + 2, W, Cp)

        # At image boundaries the computed halo rows came from dummy input
        # rows; replace them with conv2's row padding of the post-ReLU y1.
        if padding_type == "zero":
            top_fix = jnp.zeros((1, W, Cp), jnp.float32)
            bot_fix = top_fix
        elif padding_type == "reflect":
            top_fix = y1[2:3]                          # global y1 row 1
            bot_fix = y1[tile_h - 1:tile_h]            # global y1 row H-2
        else:  # replicate
            top_fix = y1[1:2]                          # global y1 row 0
            bot_fix = y1[tile_h:tile_h + 1]            # global y1 row H-1
        top = jnp.where(r == 0, top_fix, y1[0:1])
        bot = jnp.where(r == num_r - 1, bot_fix, y1[tile_h + 1:tile_h + 2])
        y1 = jnp.concatenate([top, y1[1:tile_h + 1], bot], axis=0)

        # conv2 over the (already row-halo'd) y1, columns padded in VMEM.
        y1p = pad_cols(y1).astype(jnp.bfloat16)        # (tile_h+2, W+2, Cp)
        y2 = conv3x3(folded_slab(y1p), tile_h, w2_ref, b2_ref)

        # Residual add in f32 (the unpadded x rows/cols live inside the block).
        res = xt[2:tile_h + 2, 1:W + 1, :].reshape(m2, Cp)
        o_ref[0] = (res + y2).reshape(tile_h, W, Cp).astype(o_ref.dtype)

    return kernel


@functools.partial(jax.jit, static_argnames=("padding_type",))
def resnet_block(x_nchw, w1, b1, w2, b2, padding_type="reflect"):
    """PyTorch ResnetBlock forward (NCHW in / NCHW out)."""
    if padding_type not in _PAD_MODE:
        raise NotImplementedError("padding [%s] is not implemented" % padding_type)
    B, C, H, W = x_nchw.shape
    if padding_type == "reflect" and (H < 2 or W < 2):
        raise ValueError("reflect padding requires H >= 2 and W >= 2")

    Cp = _round_up(C, _LANE)
    tile_h = _pick_tile_h(H, W, Cp)
    R = H // tile_h

    # NCHW->NHWC once at the block boundary; channels zero-padded to a lane
    # multiple so every in-kernel load/store/matmul is lane-dense.
    x = jnp.transpose(x_nchw, (0, 2, 3, 1)).astype(jnp.float32)
    if Cp != C:
        x = jnp.pad(x, ((0, 0), (0, 0), (0, 0), (0, Cp - C)))

    # Spatial pad for conv1 with the module's mode, then one dummy zero row on
    # top/bottom so every row tile reads a uniform (tile_h + 4)-row window
    # (2-row halo because of the two stacked 3x3 convs).
    xp = jnp.pad(x, ((0, 0), (1, 1), (1, 1), (0, 0)), mode=_PAD_MODE[padding_type])
    xpp = jnp.pad(xp, ((0, 0), (1, 1), (0, 0), (0, 0)))
    # Overlapping row tiles materialized once (standard Blocked BlockSpecs
    # only; halo duplication is 4/tile_h of the image).
    x_tiles = jnp.stack(
        [xpp[:, r * tile_h:r * tile_h + tile_h + 4] for r in range(R)], axis=1
    ).reshape(B * R, tile_h + 4, W + 2, Cp)

    def prep_w(w):
        # (Cout, Cin, 3, 3) -> (kh, kw*Cp + cin, cout) bf16: kw folded into K
        # so each conv is 3 MXU matmuls with K = 3*Cp instead of 9 with K = Cp.
        wm = jnp.transpose(w, (2, 3, 1, 0)).astype(jnp.float32)
        if Cp != C:
            wm = jnp.pad(wm, ((0, 0), (0, 0), (0, Cp - C), (0, Cp - C)))
        return wm.reshape(3, 3 * Cp, Cp).astype(jnp.bfloat16)

    def prep_b(b):
        bm = b.astype(jnp.float32).reshape(1, C)
        if Cp != C:
            bm = jnp.pad(bm, ((0, 0), (0, Cp - C)))
        return bm

    kernel = _make_resnet_block_kernel(tile_h, W, Cp, padding_type)

    out = pl.pallas_call(
        kernel,
        out_shape=jax.ShapeDtypeStruct((B, H, W, Cp), jnp.float32),
        grid_spec=pltpu.PrefetchScalarGridSpec(
            num_scalar_prefetch=0,
            grid=(B, R),  # multiple steps per core -> DMA overlaps compute
            in_specs=[
                pl.BlockSpec((1, tile_h + 4, W + 2, Cp),
                             lambda b, r: (b * R + r, 0, 0, 0)),
                pl.BlockSpec((3, 3 * Cp, Cp), lambda b, r: (0, 0, 0)),
                pl.BlockSpec((1, Cp), lambda b, r: (0, 0)),
                pl.BlockSpec((3, 3 * Cp, Cp), lambda b, r: (0, 0, 0)),
                pl.BlockSpec((1, Cp), lambda b, r: (0, 0)),
            ],
            out_specs=pl.BlockSpec((1, tile_h, W, Cp),
                                   lambda b, r: (b, r, 0, 0)),
        ),
        compiler_params=pltpu.CompilerParams(
            dimension_semantics=("parallel", "parallel"),
            vmem_limit_bytes=_vmem_limit_bytes(),
        ),
    )(x_tiles, prep_w(w1), prep_b(b1), prep_w(w2), prep_b(b2))

    if Cp != C:
        out = out[..., :C]                     # drop channel padding
    return jnp.transpose(out, (0, 3, 1, 2)).astype(x_nchw.dtype)


def init_params(key, dim, gain=0.02):
    """xavier_normal_(gain=0.02) conv weights + zero biases, mirroring
    BaseNetwork.init_weights(init_type='xavier')."""
    fan = dim * 3 * 3
    std = gain * (2.0 / (fan + fan)) ** 0.5
    k1, k2 = jax.random.split(key)
    w1 = std * jax.random.normal(k1, (dim, dim, 3, 3), dtype=jnp.float32)
    w2 = std * jax.random.normal(k2, (dim, dim, 3, 3), dtype=jnp.float32)
    b1 = jnp.zeros((dim,), jnp.float32)
    b2 = jnp.zeros((dim,), jnp.float32)
    return w1, b1, w2, b2


if __name__ == "__main__":
    key = jax.random.PRNGKey(0)
    kx, kw = jax.random.split(key)

    B, dim, H, W = 2, 4, 16, 16
    padding_type = "reflect"   # ResnetBlock's typical instantiation

    x = jax.random.normal(kx, (B, dim, H, W), dtype=jnp.float32)
    w1, b1, w2, b2 = init_params(kw, dim)

    y = resnet_block(x, w1, b1, w2, b2, padding_type=padding_type)
    y = jax.block_until_ready(y)

    # pure-JAX reference with PyTorch ResnetBlock semantics
    def ref_conv(v, w, b):
        mode = _PAD_MODE[padding_type]
        vp = jnp.pad(v, ((0, 0), (0, 0), (1, 1), (1, 1)), mode=mode)
        out = jax.lax.conv_general_dilated(
            vp, w, window_strides=(1, 1), padding="VALID",
            dimension_numbers=("NCHW", "OIHW", "NCHW"))
        return out + b.reshape(1, -1, 1, 1)

    y_ref = x + ref_conv(jnp.maximum(ref_conv(x, w1, b1), 0.0), w2, b2)

    assert y.shape == (B, dim, H, W), y.shape
    # bf16 MXU feeds with f32 accumulation -> small (<~1e-3) deviation allowed
    assert jnp.allclose(y, y_ref, atol=2e-3, rtol=2e-3), \
        float(jnp.max(jnp.abs(y - y_ref)))

    print("KERNEL_OK")
</pallas_src>

<mosaic_0001>
module attributes {stable_mosaic.version = 11 : i64} {
  func.func @kernel(%arg0: i32, %arg1: i32, %arg2: memref<1x12x18x128xf32, #tpu.memory_space<vmem>>, %arg3: memref<3x384x128xbf16, #tpu.memory_space<vmem>>, %arg4: memref<1x128xf32, #tpu.memory_space<vmem>>, %arg5: memref<3x384x128xbf16, #tpu.memory_space<vmem>>, %arg6: memref<1x128xf32, #tpu.memory_space<vmem>>, %arg7: memref<1x8x16x128xf32, #tpu.memory_space<vmem>>) attributes {dimension_semantics = [#tpu.dimension_semantics<parallel>, #tpu.dimension_semantics<parallel>], iteration_bounds = array<i64: 2, 2>, scalar_prefetch = 0 : i64, scratch_operands = 0 : i64, tpu.core_type = #tpu.core_type<tc>, window_params = [{transform_indices = @transform_0, window_bounds = array<i64: 1, 12, 18, 128>}, {pipeline_mode = #tpu.pipeline_mode<synchronous>, transform_indices = @transform_1, window_bounds = array<i64: 3, 384, 128>}, {pipeline_mode = #tpu.pipeline_mode<synchronous>, transform_indices = @transform_2, window_bounds = array<i64: 1, 128>}, {pipeline_mode = #tpu.pipeline_mode<synchronous>, transform_indices = @transform_3, window_bounds = array<i64: 3, 384, 128>}, {pipeline_mode = #tpu.pipeline_mode<synchronous>, transform_indices = @transform_4, window_bounds = array<i64: 1, 128>}, {transform_indices = @transform_5, window_bounds = array<i64: 1, 8, 16, 128>}]} {
    %c0 = arith.constant 0 : index
    %c0_0 = arith.constant 0 : index
    %c0_1 = arith.constant 0 : index
    %c0_2 = arith.constant 0 : index
    %0 = vector.load %arg2[%c0, %c0_0, %c0_1, %c0_2] : memref<1x12x18x128xf32, #tpu.memory_space<vmem>>, vector<1x12x18x128xf32>
    %1 = vector.shape_cast %0 : vector<1x12x18x128xf32> to vector<12x18x128xf32>
    %2 = arith.truncf %1 : vector<12x18x128xf32> to vector<12x18x128xbf16>
    %3 = vector.extract_strided_slice %2 {offsets = [0, 0, 0], sizes = [12, 16, 128], strides = [1, 1, 1]} : vector<12x18x128xbf16> to vector<12x16x128xbf16>
    %4 = vector.extract_strided_slice %2 {offsets = [0, 1, 0], sizes = [12, 16, 128], strides = [1, 1, 1]} : vector<12x18x128xbf16> to vector<12x16x128xbf16>
    %5 = vector.extract_strided_slice %2 {offsets = [0, 2, 0], sizes = [12, 16, 128], strides = [1, 1, 1]} : vector<12x18x128xbf16> to vector<12x16x128xbf16>
    %6 = tpu.concatenate %3, %4, %5 in 2 : vector<12x16x128xbf16>, vector<12x16x128xbf16>, vector<12x16x128xbf16> -> vector<12x16x384xbf16>
    %7 = vector.shape_cast %6 : vector<12x16x384xbf16> to vector<192x384xbf16>
    %c0_3 = arith.constant 0 : index
    %c0_4 = arith.constant 0 : index
    %8 = vector.load %arg4[%c0_3, %c0_4] : memref<1x128xf32, #tpu.memory_space<vmem>>, vector<1x128xf32>
    %9 = vector.shape_cast %8 : vector<1x128xf32> to vector<1x128xf32>
    %10 = vector.broadcast %9 : vector<1x128xf32> to vector<160x128xf32>
    %11 = vector.extract_strided_slice %7 {offsets = [0, 0], sizes = [160, 384], strides = [1, 1]} : vector<192x384xbf16> to vector<160x384xbf16>
    %c0_5 = arith.constant 0 : index
    %c0_6 = arith.constant 0 : index
    %c0_7 = arith.constant 0 : index
    %12 = vector.load %arg3[%c0_5, %c0_6, %c0_7] : memref<3x384x128xbf16, #tpu.memory_space<vmem>>, vector<1x384x128xbf16>
    %13 = vector.shape_cast %12 : vector<1x384x128xbf16> to vector<384x128xbf16>
    %cst = arith.constant dense<0.000000e+00> : vector<160x128xf32>
    %14 = tpu.matmul %11, %13, %cst {dimension_numbers = #tpu.dot_dimension_numbers<[1], [0], [0], [1], [0, 0, 1, 1], [], []>} : vector<160x384xbf16>, vector<384x128xbf16>, vector<160x128xf32> -> vector<160x128xf32>
    %15 = arith.addf %10, %14 : vector<160x128xf32>
    %16 = vector.extract_strided_slice %7 {offsets = [16, 0], sizes = [160, 384], strides = [1, 1]} : vector<192x384xbf16> to vector<160x384xbf16>
    %c1 = arith.constant 1 : index
    %c0_8 = arith.constant 0 : index
    %c0_9 = arith.constant 0 : index
    %17 = vector.load %arg3[%c1, %c0_8, %c0_9] : memref<3x384x128xbf16, #tpu.memory_space<vmem>>, vector<1x384x128xbf16>
    %18 = vector.shape_cast %17 : vector<1x384x128xbf16> to vector<384x128xbf16>
    %cst_10 = arith.constant dense<0.000000e+00> : vector<160x128xf32>
    %19 = tpu.matmul %16, %18, %cst_10 {dimension_numbers = #tpu.dot_dimension_numbers<[1], [0], [0], [1], [0, 0, 1, 1], [], []>} : vector<160x384xbf16>, vector<384x128xbf16>, vector<160x128xf32> -> vector<160x128xf32>
    %20 = arith.addf %15, %19 : vector<160x128xf32>
    %21 = vector.extract_strided_slice %7 {offsets = [32, 0], sizes = [160, 384], strides = [1, 1]} : vector<192x384xbf16> to vector<160x384xbf16>
    %c2 = arith.constant 2 : index
    %c0_11 = arith.constant 0 : index
    %c0_12 = arith.constant 0 : index
    %22 = vector.load %arg3[%c2, %c0_11, %c0_12] : memref<3x384x128xbf16, #tpu.memory_space<vmem>>, vector<1x384x128xbf16>
    %23 = vector.shape_cast %22 : vector<1x384x128xbf16> to vector<384x128xbf16>
    %cst_13 = arith.constant dense<0.000000e+00> : vector<160x128xf32>
    %24 = tpu.matmul %21, %23, %cst_13 {dimension_numbers = #tpu.dot_dimension_numbers<[1], [0], [0], [1], [0, 0, 1, 1], [], []>} : vector<160x384xbf16>, vector<384x128xbf16>, vector<160x128xf32> -> vector<160x128xf32>
    %25 = arith.addf %20, %24 : vector<160x128xf32>
    %cst_14 = arith.constant 0.000000e+00 : f32
    %26 = vector.broadcast %cst_14 : f32 to vector<160x128xf32>
    %27 = arith.maximumf %25, %26 : vector<160x128xf32>
    %28 = vector.shape_cast %27 : vector<160x128xf32> to vector<10x16x128xf32>
    %29 = vector.extract_strided_slice %28 {offsets = [2, 0, 0], sizes = [1, 16, 128], strides = [1, 1, 1]} : vector<10x16x128xf32> to vector<1x16x128xf32>
    %30 = vector.extract_strided_slice %28 {offsets = [7, 0, 0], sizes = [1, 16, 128], strides = [1, 1, 1]} : vector<10x16x128xf32> to vector<1x16x128xf32>
    %c0_i32 = arith.constant 0 : i32
    %31 = arith.cmpi eq, %arg1, %c0_i32 : i32
    %32 = vector.extract_strided_slice %28 {offsets = [0, 0, 0], sizes = [1, 16, 128], strides = [1, 1, 1]} : vector<10x16x128xf32> to vector<1x16x128xf32>
    %33 = arith.select %31, %29, %32 : vector<1x16x128xf32>
    %c1_i32 = arith.constant 1 : i32
    %34 = arith.cmpi eq, %arg1, %c1_i32 : i32
    %35 = vector.extract_strided_slice %28 {offsets = [9, 0, 0], sizes = [1, 16, 128], strides = [1, 1, 1]} : vector<10x16x128xf32> to vector<1x16x128xf32>
    %36 = arith.select %34, %30, %35 : vector<1x16x128xf32>
    %37 = vector.extract_strided_slice %28 {offsets = [1, 0, 0], sizes = [8, 16, 128], strides = [1, 1, 1]} : vector<10x16x128xf32> to vector<8x16x128xf32>
    %38 = tpu.concatenate %33, %37, %36 in 0 : vector<1x16x128xf32>, vector<8x16x128xf32>, vector<1x16x128xf32> -> vector<10x16x128xf32>
    %39 = vector.extract_strided_slice %38 {offsets = [0, 1, 0], sizes = [10, 1, 128], strides = [1, 1, 1]} : vector<10x16x128xf32> to vector<10x1x128xf32>
    %40 = vector.extract_strided_slice %38 {offsets = [0, 14, 0], sizes = [10, 1, 128], strides = [1, 1, 1]} : vector<10x16x128xf32> to vector<10x1x128xf32>
    %41 = tpu.concatenate %39, %38, %40 in 1 : vector<10x1x128xf32>, vector<10x16x128xf32>, vector<10x1x128xf32> -> vector<10x18x128xf32>
    %42 = arith.truncf %41 : vector<10x18x128xf32> to vector<10x18x128xbf16>
    %43 = vector.extract_strided_slice %42 {offsets = [0, 0, 0], sizes = [10, 16, 128], strides = [1, 1, 1]} : vector<10x18x128xbf16> to vector<10x16x128xbf16>
    %44 = vector.extract_strided_slice %42 {offsets = [0, 1, 0], sizes = [10, 16, 128], strides = [1, 1, 1]} : vector<10x18x128xbf16> to vector<10x16x128xbf16>
    %45 = vector.extract_strided_slice %42 {offsets = [0, 2, 0], sizes = [10, 16, 128], strides = [1, 1, 1]} : vector<10x18x128xbf16> to vector<10x16x128xbf16>
    %46 = tpu.concatenate %43, %44, %45 in 2 : vector<10x16x128xbf16>, vector<10x16x128xbf16>, vector<10x16x128xbf16> -> vector<10x16x384xbf16>
    %47 = vector.shape_cast %46 : vector<10x16x384xbf16> to vector<160x384xbf16>
    %c0_15 = arith.constant 0 : index
    %c0_16 = arith.constant 0 : index
    %48 = vector.load %arg6[%c0_15, %c0_16] : memref<1x128xf32, #tpu.memory_space<vmem>>, vector<1x128xf32>
    %49 = vector.shape_cast %48 : vector<1x128xf32> to vector<1x128xf32>
    %50 = vector.broadcast %49 : vector<1x128xf32> to vector<128x128xf32>
    %51 = vector.extract_strided_slice %47 {offsets = [0, 0], sizes = [128, 384], strides = [1, 1]} : vector<160x384xbf16> to vector<128x384xbf16>
    %c0_17 = arith.constant 0 : index
    %c0_18 = arith.constant 0 : index
    %c0_19 = arith.constant 0 : index
    %52 = vector.load %arg5[%c0_17, %c0_18, %c0_19] : memref<3x384x128xbf16, #tpu.memory_space<vmem>>, vector<1x384x128xbf16>
    %53 = vector.shape_cast %52 : vector<1x384x128xbf16> to vector<384x128xbf16>
    %cst_20 = arith.constant dense<0.000000e+00> : vector<128x128xf32>
    %54 = tpu.matmul %51, %53, %cst_20 {dimension_numbers = #tpu.dot_dimension_numbers<[1], [0], [0], [1], [0, 0, 1, 1], [], []>} : vector<128x384xbf16>, vector<384x128xbf16>, vector<128x128xf32> -> vector<128x128xf32>
    %55 = arith.addf %50, %54 : vector<128x128xf32>
    %56 = vector.extract_strided_slice %47 {offsets = [16, 0], sizes = [128, 384], strides = [1, 1]} : vector<160x384xbf16> to vector<128x384xbf16>
    %c1_21 = arith.constant 1 : index
    %c0_22 = arith.constant 0 : index
    %c0_23 = arith.constant 0 : index
    %57 = vector.load %arg5[%c1_21, %c0_22, %c0_23] : memref<3x384x128xbf16, #tpu.memory_space<vmem>>, vector<1x384x128xbf16>
    %58 = vector.shape_cast %57 : vector<1x384x128xbf16> to vector<384x128xbf16>
    %cst_24 = arith.constant dense<0.000000e+00> : vector<128x128xf32>
    %59 = tpu.matmul %56, %58, %cst_24 {dimension_numbers = #tpu.dot_dimension_numbers<[1], [0], [0], [1], [0, 0, 1, 1], [], []>} : vector<128x384xbf16>, vector<384x128xbf16>, vector<128x128xf32> -> vector<128x128xf32>
    %60 = arith.addf %55, %59 : vector<128x128xf32>
    %61 = vector.extract_strided_slice %47 {offsets = [32, 0], sizes = [128, 384], strides = [1, 1]} : vector<160x384xbf16> to vector<128x384xbf16>
    %c2_25 = arith.constant 2 : index
    %c0_26 = arith.constant 0 : index
    %c0_27 = arith.constant 0 : index
    %62 = vector.load %arg5[%c2_25, %c0_26, %c0_27] : memref<3x384x128xbf16, #tpu.memory_space<vmem>>, vector<1x384x128xbf16>
    %63 = vector.shape_cast %62 : vector<1x384x128xbf16> to vector<384x128xbf16>
    %cst_28 = arith.constant dense<0.000000e+00> : vector<128x128xf32>
    %64 = tpu.matmul %61, %63, %cst_28 {dimension_numbers = #tpu.dot_dimension_numbers<[1], [0], [0], [1], [0, 0, 1, 1], [], []>} : vector<128x384xbf16>, vector<384x128xbf16>, vector<128x128xf32> -> vector<128x128xf32>
    %65 = arith.addf %60, %64 : vector<128x128xf32>
    %66 = vector.extract_strided_slice %1 {offsets = [2, 1, 0], sizes = [8, 16, 128], strides = [1, 1, 1]} : vector<12x18x128xf32> to vector<8x16x128xf32>
    %67 = vector.shape_cast %66 : vector<8x16x128xf32> to vector<128x128xf32>
    %68 = arith.addf %67, %65 : vector<128x128xf32>
    %69 = vector.shape_cast %68 : vector<128x128xf32> to vector<8x16x128xf32>
    %c0_29 = arith.constant 0 : index
    %c0_30 = arith.constant 0 : index
    %c0_31 = arith.constant 0 : index
    %c0_32 = arith.constant 0 : index
    %70 = vector.load %arg7[%c0_29, %c0_30, %c0_31, %c0_32] : memref<1x8x16x128xf32, #tpu.memory_space<vmem>>, vector<1x8x16x128xf32>
    %71 = vector.shape_cast %70 : vector<1x8x16x128xf32> to vector<8x16x128xf32>
    %72 = vector.shape_cast %69 : vector<8x16x128xf32> to vector<1x8x16x128xf32>
    tpu.vector_store %arg7[%c0_29, %c0_30, %c0_31, %c0_32], %72 {strides = array<i32>} : memref<1x8x16x128xf32, #tpu.memory_space<vmem>>, vector<1x8x16x128xf32>,
    return
  }
  func.func @transform_0(%arg0: i32, %arg1: i32) -> (i32, i32, i32, i32) {
    %c2_i32 = arith.constant 2 : i32
    %0 = arith.muli %arg0, %c2_i32 : i32
    %1 = arith.addi %0, %arg1 : i32
    %c0_i32 = arith.constant 0 : i32
    %c0_i32_0 = arith.constant 0 : i32
    %c0_i32_1 = arith.constant 0 : i32
    %c0_i32_2 = arith.constant 0 : i32
    return %1, %c0_i32, %c0_i32_0, %c0_i32_1 : i32, i32, i32, i32
  }
  func.func @transform_1(%arg0: i32, %arg1: i32) -> (i32, i32, i32) {
    %c0_i32 = arith.constant 0 : i32
    %c0_i32_0 = arith.constant 0 : i32
    %c0_i32_1 = arith.constant 0 : i32
    %c0_i32_2 = arith.constant 0 : i32
    return %c0_i32, %c0_i32_0, %c0_i32_1 : i32, i32, i32
  }
  func.func @transform_2(%arg0: i32, %arg1: i32) -> (i32, i32) {
    %c0_i32 = arith.constant 0 : i32
    %c0_i32_0 = arith.constant 0 : i32
    %c0_i32_1 = arith.constant 0 : i32
    return %c0_i32, %c0_i32_0 : i32, i32
  }
  func.func @transform_3(%arg0: i32, %arg1: i32) -> (i32, i32, i32) {
    %c0_i32 = arith.constant 0 : i32
    %c0_i32_0 = arith.constant 0 : i32
    %c0_i32_1 = arith.constant 0 : i32
    %c0_i32_2 = arith.constant 0 : i32
    return %c0_i32, %c0_i32_0, %c0_i32_1 : i32, i32, i32
  }
  func.func @transform_4(%arg0: i32, %arg1: i32) -> (i32, i32) {
    %c0_i32 = arith.constant 0 : i32
    %c0_i32_0 = arith.constant 0 : i32
    %c0_i32_1 = arith.constant 0 : i32
    return %c0_i32, %c0_i32_0 : i32, i32
  }
  func.func @transform_5(%arg0: i32, %arg1: i32) -> (i32, i32, i32, i32) {
    %c0_i32 = arith.constant 0 : i32
    %c0_i32_0 = arith.constant 0 : i32
    %c0_i32_1 = arith.constant 0 : i32
    return %arg0, %arg1, %c0_i32, %c0_i32_0 : i32, i32, i32, i32
  }
}

</mosaic_0001>

<llo_original>
// kernel: resnet_block.1
$region0: #{resnet_block.1}
  #allocation0 [shape = 'u32[]', space=smem, size = 0x4, offset = 0x4, fixed_abs, tag = 'smem constant byte address 0x4 - core index']
  #allocation1 [shape = 'u32[72,128]{1,0:T(1,128)}', space=vmem, size = 0x9000, scoped, tag = 'internal scratch']
  %s0 = inlined_call_operand.vmem [shape: f32[4,12,18,128], index: 0, kind: input, shape index: {}]
  %s1 = inlined_call_operand.vmem [shape: bf16[3,384,128], index: 1, kind: input, shape index: {}]
  %s2 = inlined_call_operand.vmem [shape: f32[1,128], index: 2, kind: input, shape index: {}]
  %s3 = inlined_call_operand.vmem [shape: bf16[3,384,128], index: 3, kind: input, shape index: {}]
  %s4 = inlined_call_operand.vmem [shape: f32[1,128], index: 4, kind: input, shape index: {}]
  %s5 = inlined_call_operand.vmem [shape: f32[2,16,16,128], index: 5, kind: output, shape index: {}]
  %s6 = sld [smem:[#allocation0]]
  $region53: #{resnet_block.1} parent=0
    _
  %s8 = ssub.s32 1, %s6
  %s9 = scalar_select 0, %s8, %s6
  loop: start=0, step=1, limit=6
  $region2: #{resnet_block.1} parent=0 // loop_pre_header
    _
  $region3: #{resnet_block.1} parent=0 // loop_header
    %s11 = sphi 0, %s15
    %p12 = scmp.ge.s32.totalorder %s11, 6
    %s18 = sphi 0, %s30
    %s19 = sphi 0, %s26
    %s20 = sphi 0, %s18
    %s21 = sphi 0, %s19
    %s22 = sphi 0, %s20
    %s23 = sphi 0, %s21
    %s37 = sphi 0, %s39
    %s40 = sphi 0, %s37
    %s41 = sphi 0, %s40
    %s57 = sphi 0, %s41
    %s61 = sphi 0, %s61
    %s63 = sphi 0, %s61
    %s64 = sphi 0, %s63
    %s78 = sphi 0, %s64
    %s82 = sphi 0, %s82
    %s84 = sphi 0, %s82
    %s85 = sphi 0, %s84
    %s99 = sphi 0, %s85
    %s103 = sphi 0, %s103
    %s105 = sphi 0, %s103
    %s106 = sphi 0, %s105
    %s120 = sphi 0, %s106
    %s124 = sphi 0, %s124
    %s126 = sphi 0, %s124
    %s127 = sphi 0, %s126
    %s141 = sphi 0, %s127
    %s149 = sphi 0, %s151
    %s152 = sphi 0, %s149
    %s153 = sphi 0, %s152
    %s169 = sphi 0, %s153
  $region4: #{resnet_block.1} parent=0 // loop_header_branch
    %14 = sbr.rel (%p12) target = $region8
  $region5: #{resnet_block.1} parent=0 // loop_body
    %s16 = ssub.s32 %s11, 1
    %s17 = ssub.s32 %s11, 2
    %s24 = sadd.s32 1, %s19
    %p25 = scmp.ge.s32.totalorder %s24, 2
    %s26 = scalar_select %p25, 0, %s24
    %s27 = sadd.s32 1, %s18
    %s28 = scalar_select %p25, %s27, %s18
    %p29 = scmp.ge.s32.totalorder %s28, 2
    %s30 = scalar_select %p29, 0, %s28
    %s31 = smul.u32 %s18, 2
    %s32 = sadd.s32 %s31, %s19
    %s33 = smul.u32 %s30, 2
    %s34 = sadd.s32 %s33, %s26
    %s35 = ssub.s32 %s32, %s34
    %p36 = scmp.eq.s32.totalorder %s35, 0
    %s38 = sadd.s32 %s37, 1
    %s39 = scalar_select %p36, %s37, %s38
    %p42 = pneg %p36
    %p43 = scmp.eq.s32.totalorder %s11, 3
    %p44 = por %p42, %p43
    %p45 = scmp.ne.s32.totalorder %s37, %s40
    %p46 = scmp.eq.s32.totalorder %s11, 0
    %p47 = por %p45, %p46
    %p48 = scmp.ne.s32.totalorder %s37, %s40
    %p49 = scmp.eq.s32.totalorder %s16, 3
    %p50 = por %p48, %p49
    %p51 = scmp.ne.s32.totalorder %s40, %s41
    %p52 = scmp.eq.s32.totalorder %s16, 0
    %p53 = por %p51, %p52
    %p54 = scmp.ne.s32.totalorder %s40, %s41
    %p55 = scmp.eq.s32.totalorder %s17, 3
    %p56 = por %p54, %p55
    %p58 = scmp.ne.s32.totalorder %s41, %s57
    %p59 = scmp.eq.s32.totalorder %s17, 0
    %p60 = por %p58, %p59
    %s62 = sadd.s32 %s61, 1
    %p65 = scmp.eq.s32.totalorder %s11, 3
    %p66 = scmp.ne.s32.totalorder %s61, %s63
    %p67 = scmp.eq.s32.totalorder %s11, 0
    %p68 = por %p66, %p67
    %p69 = scmp.ne.s32.totalorder %s61, %s63
    %p70 = scmp.eq.s32.totalorder %s16, 3
    %p71 = por %p69, %p70
    %p72 = scmp.ne.s32.totalorder %s63, %s64
    %p73 = scmp.eq.s32.totalorder %s16, 0
    %p74 = por %p72, %p73
    %p75 = scmp.ne.s32.totalorder %s63, %s64
    %p76 = scmp.eq.s32.totalorder %s17, 3
    %p77 = por %p75, %p76
    %p79 = scmp.ne.s32.totalorder %s64, %s78
    %p80 = scmp.eq.s32.totalorder %s17, 0
    %p81 = por %p79, %p80
    %s83 = sadd.s32 %s82, 1
    %p86 = scmp.eq.s32.totalorder %s11, 3
    %p87 = scmp.ne.s32.totalorder %s82, %s84
    %p88 = scmp.eq.s32.totalorder %s11, 0
    %p89 = por %p87, %p88
    %p90 = scmp.ne.s32.totalorder %s82, %s84
    %p91 = scmp.eq.s32.totalorder %s16, 3
    %p92 = por %p90, %p91
    %p93 = scmp.ne.s32.totalorder %s84, %s85
    %p94 = scmp.eq.s32.totalorder %s16, 0
    %p95 = por %p93, %p94
    %p96 = scmp.ne.s32.totalorder %s84, %s85
    %p97 = scmp.eq.s32.totalorder %s17, 3
    %p98 = por %p96, %p97
    %p100 = scmp.ne.s32.totalorder %s85, %s99
    %p101 = scmp.eq.s32.totalorder %s17, 0
    %p102 = por %p100, %p101
    %s104 = sadd.s32 %s103, 1
    %p107 = scmp.eq.s32.totalorder %s11, 3
    %p108 = scmp.ne.s32.totalorder %s103, %s105
    %p109 = scmp.eq.s32.totalorder %s11, 0
    %p110 = por %p108, %p109
    %p111 = scmp.ne.s32.totalorder %s103, %s105
    %p112 = scmp.eq.s32.totalorder %s16, 3
    %p113 = por %p111, %p112
    %p114 = scmp.ne.s32.totalorder %s105, %s106
    %p115 = scmp.eq.s32.totalorder %s16, 0
    %p116 = por %p114, %p115
    %p117 = scmp.ne.s32.totalorder %s105, %s106
    %p118 = scmp.eq.s32.totalorder %s17, 3
    %p119 = por %p117, %p118
    %p121 = scmp.ne.s32.totalorder %s106, %s120
    %p122 = scmp.eq.s32.totalorder %s17, 0
    %p123 = por %p121, %p122
    %s125 = sadd.s32 %s124, 1
    %p128 = scmp.eq.s32.totalorder %s11, 3
    %p129 = scmp.ne.s32.totalorder %s124, %s126
    %p130 = scmp.eq.s32.totalorder %s11, 0
    %p131 = por %p129, %p130
    %p132 = scmp.ne.s32.totalorder %s124, %s126
    %p133 = scmp.eq.s32.totalorder %s16, 3
    %p134 = por %p132, %p133
    %p135 = scmp.ne.s32.totalorder %s126, %s127
    %p136 = scmp.eq.s32.totalorder %s16, 0
    %p137 = por %p135, %p136
    %p138 = scmp.ne.s32.totalorder %s126, %s127
    %p139 = scmp.eq.s32.totalorder %s17, 3
    %p140 = por %p138, %p139
    %p142 = scmp.ne.s32.totalorder %s127, %s141
    %p143 = scmp.eq.s32.totalorder %s17, 0
    %p144 = por %p142, %p143
    %s145 = ssub.s32 %s18, %s30
    %s146 = ssub.s32 %s19, %s26
    %s147 = sor.u32 %s145, %s146
    %p148 = scmp.eq.s32.totalorder %s147, 0
    %s150 = sadd.s32 %s149, 1
    %s151 = scalar_select %p148, %s149, %s150
    %p154 = pneg %p148
    %p155 = scmp.eq.s32.totalorder %s11, 3
    %p156 = por %p154, %p155
    %p157 = scmp.ne.s32.totalorder %s149, %s152
    %p158 = scmp.eq.s32.totalorder %s11, 0
    %p159 = por %p157, %p158
    %p160 = scmp.ne.s32.totalorder %s149, %s152
    %p161 = scmp.eq.s32.totalorder %s16, 3
    %p162 = por %p160, %p161
    %p163 = scmp.ne.s32.totalorder %s152, %s153
    %p164 = scmp.eq.s32.totalorder %s16, 0
    %p165 = por %p163, %p164
    %p166 = scmp.ne.s32.totalorder %s152, %s153
    %p167 = scmp.eq.s32.totalorder %s17, 3
    %p168 = por %p166, %p167
    %p170 = scmp.ne.s32.totalorder %s153, %s169
    %p171 = scmp.eq.s32.totalorder %s17, 0
    %p172 = por %p170, %p171
    %p173 = scmp.le.s32.totalorder 1, %s11
    %p174 = scmp.lt.s32.totalorder %s11, 5
    %p175 = pnand %p173, %p174
    %p176 = pneg %p175
    // Predicated region
    $region9: #{resnet_block.1} parent=5 // pred_check
      _
    $region10: #{resnet_block.1} parent=5 // pred_check_branch
      %178 = sbr.rel (%p175) target = $region12
    $region11: #{resnet_block.1} parent=5 // pred_region
      %s179 = ssub.s32 %s11, 1
      // Predicated region
      $region13: #{resnet_block.1} parent=11 // pred_check
        %p180 = pneg %p74
      $region14: #{resnet_block.1} parent=11 // pred_check_branch
        %182 = sbr.rel (%p180) target = $region16
      $region15: #{resnet_block.1} parent=11 // pred_region
        _
      $region16: #{resnet_block.1} parent=11 // pred_fallthru
        _
      // Predicated region
      $region17: #{resnet_block.1} parent=11 // pred_check
        %p183 = pneg %p95
      $region18: #{resnet_block.1} parent=11 // pred_check_branch
        %185 = sbr.rel (%p183) target = $region20
      $region19: #{resnet_block.1} parent=11 // pred_region
        _
      $region20: #{resnet_block.1} parent=11 // pred_fallthru
        _
      // Predicated region
      $region21: #{resnet_block.1} parent=11 // pred_check
        %p186 = pneg %p116
      $region22: #{resnet_block.1} parent=11 // pred_check_branch
        %188 = sbr.rel (%p186) target = $region24
      $region23: #{resnet_block.1} parent=11 // pred_region
        _
      $region24: #{resnet_block.1} parent=11 // pred_fallthru
        _
      // Predicated region
      $region25: #{resnet_block.1} parent=11 // pred_check
        %p189 = pneg %p137
      $region26: #{resnet_block.1} parent=11 // pred_check_branch
        %191 = sbr.rel (%p189) target = $region28
      $region27: #{resnet_block.1} parent=11 // pred_region
        _
      $region28: #{resnet_block.1} parent=11 // pred_fallthru
        _
    $region12: #{resnet_block.1} parent=5 // pred_fallthru
      _
    %p192 = scmp.lt.s32.totalorder %s11, 4
    // Predicated region
    $region29: #{resnet_block.1} parent=5 // pred_check
      %p193 = pneg %p192
    $region30: #{resnet_block.1} parent=5 // pred_check_branch
      %195 = sbr.rel (%p193) target = $region32
    $region31: #{resnet_block.1} parent=5 // pred_region
      // Predicated region
      $region33: #{resnet_block.1} parent=31 // pred_check
        %p196 = pneg %p47
      $region34: #{resnet_block.1} parent=31 // pred_check_branch
        %198 = sbr.rel (%p196) target = $region36
      $region35: #{resnet_block.1} parent=31 // pred_region
        %s199 = smul.u32 %s18, 2
        %s200 = sadd.s32 %s199, %s19
        %p201 = scmp.lt.s32.totalorder %s200, 3
        %s202 = scalar_select %p201, %s200, 3
        %s203 = smul.addr %s202, 36
        %s204 = smul.addr %s203, 8
        %s205 = scalar_lea.vmem %s0, %s204
        %s206 = smul.u32 %s18, 2
        %s207 = sadd.s32 %s206, %s19
      $region36: #{resnet_block.1} parent=31 // pred_fallthru
        _
    $region32: #{resnet_block.1} parent=5 // pred_fallthru
      _
    %p208 = scmp.le.s32.totalorder 1, %s11
    %p209 = scmp.lt.s32.totalorder %s11, 5
    %p210 = pnand %p208, %p209
    %p211 = pneg %p210
    // Predicated region
    $region37: #{resnet_block.1} parent=5 // pred_check
      _
    $region38: #{resnet_block.1} parent=5 // pred_check_branch
      %213 = sbr.rel (%p210) target = $region40
    $region39: #{resnet_block.1} parent=5 // pred_region
      %s214 = ssub.s32 %s11, 1
      %s215 = smul.u32 %s20, 2
      %s216 = sadd.s32 %s215, %s21
      %p217 = scmp.lt.s32.totalorder %s216, 3
      %s218 = scalar_select %p217, %s216, 3
      %s219 = smul.addr %s218, 36
      %s220 = smul.addr %s219, 8
      %s221 = scalar_lea.vmem %s0, %s220
      %p222 = pneg %p53
      %p223 = pneg %p50
      %p224 = pneg %p74
      %p225 = pneg %p71
      %p226 = pneg %p95
      %p227 = pneg %p92
      %p228 = pneg %p116
      %p229 = pneg %p113
      %p230 = pneg %p137
      %p231 = pneg %p134
      %p232 = pneg %p165
      %p233 = pneg %p162
      %s234 = smul.u32 8, %s21
      %p235 = scmp.lt.s32.totalorder %s20, 1
      %s236 = scalar_select %p235, %s20, 1
      %p237 = scmp.lt.s32.totalorder %s234, 15
      %s238 = scalar_select %p237, %s234, 15
      %s239 = smul.addr %s238, 2
      %s240 = smul.addr %s236, 32
      %s241 = sadd.s32 %s239, %s240
      %s242 = smul.addr %s241, 8
      %s243 = scalar_lea.vmem %s5, %s242
      %s244 = smul.u32 %s20, 2
      %s245 = sadd.s32 %s244, %s21
      %p246 = scmp.lt.s32.totalorder %s245, 3
      %s247 = scalar_select %p246, %s245, 3
      %s248 = smul.addr %s247, 36
      %s249 = smul.addr %s248, 8
      %s250 = scalar_lea.vmem %s0, %s249
      %s251 = smul.u32 %s20, 2
      %s252 = sadd.s32 %s251, %s21
      %s253 = smul.u32 8, %s21
      %p254 = scmp.lt.s32.totalorder %s20, 1
      %s255 = scalar_select %p254, %s20, 1
      %p256 = scmp.lt.s32.totalorder %s253, 15
      %s257 = scalar_select %p256, %s253, 15
      %s258 = smul.addr %s257, 2
      %s259 = smul.addr %s255, 32
      %s260 = sadd.s32 %s258, %s259
      %s261 = smul.addr %s260, 8
      %s262 = scalar_lea.vmem %s5, %s261
      %s263 = smul.u32 8, %s21
      %v264 = vld [vmem:[%s250] sm:$0xff]
      %v265 = vld [vmem:[%s250 + $0x8] sm:$0xff]
      %v266 = vld [vmem:[%s250 + $0x10] sm:$0x3]
      %v267 = vld [vmem:[%s250 + $0x18] sm:$0xff]
      %v268 = vld [vmem:[%s250 + $0x20] sm:$0xff]
      %v269 = vld [vmem:[%s250 + $0x28] sm:$0x3]
      %v270 = vld [vmem:[%s250 + $0x30] sm:$0xff]
      %v271 = vld [vmem:[%s250 + $0x38] sm:$0xff]
      %v272 = vld [vmem:[%s250 + $0x40] sm:$0x3]
      %v273 = vld [vmem:[%s250 + $0x48] sm:$0xff]
      %v274 = vld [vmem:[%s250 + $0x50] sm:$0xff]
      %v275 = vld [vmem:[%s250 + $0x58] sm:$0x3]
      %v276 = vld [vmem:[%s250 + $0x60] sm:$0xff]
      %v277 = vld [vmem:[%s250 + $0x68] sm:$0xff]
      %v278 = vld [vmem:[%s250 + $0x70] sm:$0x3]
      %v279 = vld [vmem:[%s250 + $0x78] sm:$0xff]
      %v280 = vld [vmem:[%s250 + $0x80] sm:$0xff]
      %v281 = vld [vmem:[%s250 + $0x88] sm:$0x3]
      %v282 = vld [vmem:[%s250 + $0x90] sm:$0xff]
      %v283 = vld [vmem:[%s250 + $0x98] sm:$0xff]
      %v284 = vld [vmem:[%s250 + $0xa0] sm:$0x3]
      %v285 = vld [vmem:[%s250 + $0xa8] sm:$0xff]
      %v286 = vld [vmem:[%s250 + $0xb0] sm:$0xff]
      %v287 = vld [vmem:[%s250 + $0xb8] sm:$0x3]
      %v288 = vld [vmem:[%s250 + $0xc0] sm:$0xff]
      %v289 = vld [vmem:[%s250 + $0xc8] sm:$0xff]
      %v290 = vld [vmem:[%s250 + $0xd0] sm:$0x3]
      %v291 = vld [vmem:[%s250 + $0xd8] sm:$0xff]
      %v292 = vld [vmem:[%s250 + $0xe0] sm:$0xff]
      %v293 = vld [vmem:[%s250 + $0xe8] sm:$0x3]
      %v294 = vld [vmem:[%s250 + $0xf0] sm:$0xff]
      %v295 = vld [vmem:[%s250 + $0xf8] sm:$0xff]
      %v296 = vld [vmem:[%s250 + $0x100] sm:$0x3]
      %v297 = vld [vmem:[%s250 + $0x108] sm:$0xff]
      %v298 = vld [vmem:[%s250 + $0x110] sm:$0xff]
      %v299 = vld [vmem:[%s250 + $0x118] sm:$0x3]
      %v300 = vpack.c.bf16 %v264, %v264
      %v301 = vpack.c.bf16 %v265, %v265
      %v302 = vpack.c.bf16 %v266, %v266
      %v303 = vpack.c.bf16 %v267, %v267
      %v304 = vpack.c.bf16 %v268, %v268
      %v305 = vpack.c.bf16 %v269, %v269
      %v306 = vpack.c.bf16 %v270, %v270
      %v307 = vpack.c.bf16 %v271, %v271
      %v308 = vpack.c.bf16 %v272, %v272
      %v309 = vpack.c.bf16 %v273, %v273
      %v310 = vpack.c.bf16 %v274, %v274
      %v311 = vpack.c.bf16 %v275, %v275
      %v312 = vpack.c.bf16 %v276, %v276
      %v313 = vpack.c.bf16 %v277, %v277
      %v314 = vpack.c.bf16 %v278, %v278
      %v315 = vpack.c.bf16 %v279, %v279
      %v316 = vpack.c.bf16 %v280, %v280
      %v317 = vpack.c.bf16 %v281, %v281
      %v318 = vpack.c.bf16 %v282, %v282
      %v319 = vpack.c.bf16 %v283, %v283
      %v320 = vpack.c.bf16 %v284, %v284
      %v321 = vpack.c.bf16 %v285, %v285
      %v322 = vpack.c.bf16 %v286, %v286
      %v323 = vpack.c.bf16 %v287, %v287
      %v324 = vpack.c.bf16 %v288, %v288
      %v325 = vpack.c.bf16 %v289, %v289
      %v326 = vpack.c.bf16 %v290, %v290
      %v327 = vpack.c.bf16 %v291, %v291
      %v328 = vpack.c.bf16 %v292, %v292
      %v329 = vpack.c.bf16 %v293, %v293
      %v330 = vpack.c.bf16 %v294, %v294
      %v331 = vpack.c.bf16 %v295, %v295
      %v332 = vpack.c.bf16 %v296, %v296
      %v333 = vpack.c.bf16 %v297, %v297
      %v334 = vpack.c.bf16 %v298, %v298
      %v335 = vpack.c.bf16 %v299, %v299
      %v360 = vunpack.c.l.b16 %v300
      %v361 = vunpack.c.l.b16 %v301
      %v362 = vunpack.c.l.b16 %v303
      %v363 = vunpack.c.l.b16 %v304
      %v364 = vunpack.c.l.b16 %v306
      %v365 = vunpack.c.l.b16 %v307
      %v366 = vunpack.c.l.b16 %v309
      %v367 = vunpack.c.l.b16 %v310
      %v368 = vunpack.c.l.b16 %v312
      %v369 = vunpack.c.l.b16 %v313
      %v370 = vunpack.c.l.b16 %v315
      %v371 = vunpack.c.l.b16 %v316
      %v372 = vunpack.c.l.b16 %v318
      %v373 = vunpack.c.l.b16 %v319
      %v374 = vunpack.c.l.b16 %v321
      %v375 = vunpack.c.l.b16 %v322
      %v376 = vunpack.c.l.b16 %v324
      %v377 = vunpack.c.l.b16 %v325
      %v378 = vunpack.c.l.b16 %v327
      %v379 = vunpack.c.l.b16 %v328
      %v380 = vunpack.c.l.b16 %v330
      %v381 = vunpack.c.l.b16 %v331
      %v382 = vunpack.c.l.b16 %v333
      %v383 = vunpack.c.l.b16 %v334
      %v384 = vpack.c.b16 %v361, %v360
      %v385 = vpack.c.b16 %v363, %v362
      %v386 = vpack.c.b16 %v365, %v364
      %v387 = vpack.c.b16 %v367, %v366
      %v388 = vpack.c.b16 %v369, %v368
      %v389 = vpack.c.b16 %v371, %v370
      %v390 = vpack.c.b16 %v373, %v372
      %v391 = vpack.c.b16 %v375, %v374
      %v392 = vpack.c.b16 %v377, %v376
      %v393 = vpack.c.b16 %v379, %v378
      %v394 = vpack.c.b16 %v381, %v380
      %v395 = vpack.c.b16 %v383, %v382
      %v420 = vunpack.c.l.b16 %v302
      %v421 = vunpack.c.l.b16 %v305
      %v422 = vunpack.c.l.b16 %v308
      %v423 = vunpack.c.l.b16 %v311
      %v424 = vunpack.c.l.b16 %v314
      %v425 = vunpack.c.l.b16 %v317
      %v426 = vunpack.c.l.b16 %v320
      %v427 = vunpack.c.l.b16 %v323
      %v428 = vunpack.c.l.b16 %v326
      %v429 = vunpack.c.l.b16 %v329
      %v430 = vunpack.c.l.b16 %v332
      %v431 = vunpack.c.l.b16 %v335
      %v432 = vpack.c.b16 %v420, %v420
      %v433 = vpack.c.b16 %v421, %v421
      %v434 = vpack.c.b16 %v422, %v422
      %v435 = vpack.c.b16 %v423, %v423
      %v436 = vpack.c.b16 %v424, %v424
      %v437 = vpack.c.b16 %v425, %v425
      %v438 = vpack.c.b16 %v426, %v426
      %v439 = vpack.c.b16 %v427, %v427
      %v440 = vpack.c.b16 %v428, %v428
      %v441 = vpack.c.b16 %v429, %v429
      %v442 = vpack.c.b16 %v430, %v430
      %v443 = vpack.c.b16 %v431, %v431
      %vm444 = vsmask.f32 7424
      %v446 = vshrl.u32 %v384, 16
      %v448 = vshll.u32 %v384, 16
      %v450 = vrot.slane %v448, 1
      %v451 = vor.u32 %v446, %v450
      %v453 = vshll.u32 %v432, 16
      %v455 = vrot.slane %v453, 1
      %v456 = vsel %vm444, %v451, %v455
      %v458 = vshrl.u32 %v385, 16
      %v460 = vshll.u32 %v385, 16
      %v462 = vrot.slane %v460, 1
      %v463 = vor.u32 %v458, %v462
      %v465 = vshll.u32 %v433, 16
      %v467 = vrot.slane %v465, 1
      %v468 = vsel %vm444, %v463, %v467
      %v470 = vshrl.u32 %v386, 16
      %v472 = vshll.u32 %v386, 16
      %v474 = vrot.slane %v472, 1
      %v475 = vor.u32 %v470, %v474
      %v477 = vshll.u32 %v434, 16
      %v479 = vrot.slane %v477, 1
      %v480 = vsel %vm444, %v475, %v479
      %v482 = vshrl.u32 %v387, 16
      %v484 = vshll.u32 %v387, 16
      %v486 = vrot.slane %v484, 1
      %v487 = vor.u32 %v482, %v486
      %v489 = vshll.u32 %v435, 16
      %v491 = vrot.slane %v489, 1
      %v492 = vsel %vm444, %v487, %v491
      %v494 = vshrl.u32 %v388, 16
      %v496 = vshll.u32 %v388, 16
      %v498 = vrot.slane %v496, 1
      %v499 = vor.u32 %v494, %v498
      %v501 = vshll.u32 %v436, 16
      %v503 = vrot.slane %v501, 1
      %v504 = vsel %vm444, %v499, %v503
      %v506 = vshrl.u32 %v389, 16
      %v508 = vshll.u32 %v389, 16
      %v510 = vrot.slane %v508, 1
      %v511 = vor.u32 %v506, %v510
      %v513 = vshll.u32 %v437, 16
      %v515 = vrot.slane %v513, 1
      %v516 = vsel %vm444, %v511, %v515
      %v518 = vshrl.u32 %v390, 16
      %v520 = vshll.u32 %v390, 16
      %v522 = vrot.slane %v520, 1
      %v523 = vor.u32 %v518, %v522
      %v525 = vshll.u32 %v438, 16
      %v527 = vrot.slane %v525, 1
      %v528 = vsel %vm444, %v523, %v527
      %v530 = vshrl.u32 %v391, 16
      %v532 = vshll.u32 %v391, 16
      %v534 = vrot.slane %v532, 1
      %v535 = vor.u32 %v530, %v534
      %v537 = vshll.u32 %v439, 16
      %v539 = vrot.slane %v537, 1
      %v540 = vsel %vm444, %v535, %v539
      %v542 = vshrl.u32 %v392, 16
      %v544 = vshll.u32 %v392, 16
      %v546 = vrot.slane %v544, 1
      %v547 = vor.u32 %v542, %v546
      %v549 = vshll.u32 %v440, 16
      %v551 = vrot.slane %v549, 1
      %v552 = vsel %vm444, %v547, %v551
      %v554 = vshrl.u32 %v393, 16
      %v556 = vshll.u32 %v393, 16
      %v558 = vrot.slane %v556, 1
      %v559 = vor.u32 %v554, %v558
      %v561 = vshll.u32 %v441, 16
      %v563 = vrot.slane %v561, 1
      %v564 = vsel %vm444, %v559, %v563
      %v566 = vshrl.u32 %v394, 16
      %v568 = vshll.u32 %v394, 16
      %v570 = vrot.slane %v568, 1
      %v571 = vor.u32 %v566, %v570
      %v573 = vshll.u32 %v442, 16
      %v575 = vrot.slane %v573, 1
      %v576 = vsel %vm444, %v571, %v575
      %v578 = vshrl.u32 %v395, 16
      %v580 = vshll.u32 %v395, 16
      %v582 = vrot.slane %v580, 1
      %v583 = vor.u32 %v578, %v582
      %v585 = vshll.u32 %v443, 16
      %v587 = vrot.slane %v585, 1
      %v588 = vsel %vm444, %v583, %v587
      %vm601 = vcmask 1046528
      %v602 = vrot.slane %v384, 1
      %v603 = vrot.slane %v432, 1
      %v604 = vsel %vm601, %v602, %v603
      %v605 = vrot.slane %v385, 1
      %v606 = vrot.slane %v433, 1
      %v607 = vsel %vm601, %v605, %v606
      %v608 = vrot.slane %v386, 1
      %v609 = vrot.slane %v434, 1
      %v610 = vsel %vm601, %v608, %v609
      %v611 = vrot.slane %v387, 1
      %v612 = vrot.slane %v435, 1
      %v613 = vsel %vm601, %v611, %v612
      %v614 = vrot.slane %v388, 1
      %v615 = vrot.slane %v436, 1
      %v616 = vsel %vm601, %v614, %v615
      %v617 = vrot.slane %v389, 1
      %v618 = vrot.slane %v437, 1
      %v619 = vsel %vm601, %v617, %v618
      %v620 = vrot.slane %v390, 1
      %v621 = vrot.slane %v438, 1
      %v622 = vsel %vm601, %v620, %v621
      %v623 = vrot.slane %v391, 1
      %v624 = vrot.slane %v439, 1
      %v625 = vsel %vm601, %v623, %v624
      %v626 = vrot.slane %v392, 1
      %v627 = vrot.slane %v440, 1
      %v628 = vsel %vm601, %v626, %v627
      %v629 = vrot.slane %v393, 1
      %v630 = vrot.slane %v441, 1
      %v631 = vsel %vm601, %v629, %v630
      %v632 = vrot.slane %v394, 1
      %v633 = vrot.slane %v442, 1
      %v634 = vsel %vm601, %v632, %v633
      %v635 = vrot.slane %v395, 1
      %v636 = vrot.slane %v443, 1
      %v637 = vsel %vm601, %v635, %v636
      %v650 = vld [vmem:[%s2] sm:$0x1]
      %v652 = vperm.slane %v650, 0
      %v654 = vld [vmem:[%s1] sm:$0xf]
      %v655 = vld [vmem:[%s1 + $0x4] sm:$0xf]
      %v656 = vld [vmem:[%s1 + $0x8] sm:$0xf]
      %v657 = vld [vmem:[%s1 + $0xc] sm:$0xf]
      %v658 = vld [vmem:[%s1 + $0x10] sm:$0xf]
      %v659 = vld [vmem:[%s1 + $0x14] sm:$0xf]
      %v660 = vld [vmem:[%s1 + $0x18] sm:$0xf]
      %v661 = vld [vmem:[%s1 + $0x1c] sm:$0xf]
      %v662 = vld [vmem:[%s1 + $0x20] sm:$0xf]
      %v663 = vld [vmem:[%s1 + $0x24] sm:$0xf]
      %v664 = vld [vmem:[%s1 + $0x28] sm:$0xf]
      %v665 = vld [vmem:[%s1 + $0x2c] sm:$0xf]
      %v666 = vld [vmem:[%s1 + $0x30] sm:$0xf]
      %v667 = vld [vmem:[%s1 + $0x34] sm:$0xf]
      %v668 = vld [vmem:[%s1 + $0x38] sm:$0xf]
      %v669 = vld [vmem:[%s1 + $0x3c] sm:$0xf]
      %v670 = vld [vmem:[%s1 + $0x40] sm:$0xf]
      %v671 = vld [vmem:[%s1 + $0x44] sm:$0xf]
      %v672 = vld [vmem:[%s1 + $0x48] sm:$0xf]
      %v673 = vld [vmem:[%s1 + $0x4c] sm:$0xf]
      %v674 = vld [vmem:[%s1 + $0x50] sm:$0xf]
      %v675 = vld [vmem:[%s1 + $0x54] sm:$0xf]
      %v676 = vld [vmem:[%s1 + $0x58] sm:$0xf]
      %v677 = vld [vmem:[%s1 + $0x5c] sm:$0xf]
      %v678 = vld [vmem:[%s1 + $0x60] sm:$0xf]
      %v679 = vld [vmem:[%s1 + $0x64] sm:$0xf]
      %v680 = vld [vmem:[%s1 + $0x68] sm:$0xf]
      %v681 = vld [vmem:[%s1 + $0x6c] sm:$0xf]
      %v682 = vld [vmem:[%s1 + $0x70] sm:$0xf]
      %v683 = vld [vmem:[%s1 + $0x74] sm:$0xf]
      %v684 = vld [vmem:[%s1 + $0x78] sm:$0xf]
      %v685 = vld [vmem:[%s1 + $0x7c] sm:$0xf]
      %v686 = vld [vmem:[%s1 + $0x80] sm:$0xf]
      %v687 = vld [vmem:[%s1 + $0x84] sm:$0xf]
      %v688 = vld [vmem:[%s1 + $0x88] sm:$0xf]
      %v689 = vld [vmem:[%s1 + $0x8c] sm:$0xf]
      %v690 = vld [vmem:[%s1 + $0x90] sm:$0xf]
      %v691 = vld [vmem:[%s1 + $0x94] sm:$0xf]
      %v692 = vld [vmem:[%s1 + $0x98] sm:$0xf]
      %v693 = vld [vmem:[%s1 + $0x9c] sm:$0xf]
      %v694 = vld [vmem:[%s1 + $0xa0] sm:$0xf]
      %v695 = vld [vmem:[%s1 + $0xa4] sm:$0xf]
      %v696 = vld [vmem:[%s1 + $0xa8] sm:$0xf]
      %v697 = vld [vmem:[%s1 + $0xac] sm:$0xf]
      %v698 = vld [vmem:[%s1 + $0xb0] sm:$0xf]
      %v699 = vld [vmem:[%s1 + $0xb4] sm:$0xf]
      %v700 = vld [vmem:[%s1 + $0xb8] sm:$0xf]
      %v701 = vld [vmem:[%s1 + $0xbc] sm:$0xf]
      %v750 = vunpack.c.l.b16 %v654
      %v751 = vunpack.c.l.b16 %v655
      %v752 = vunpack.c.l.b16 %v656
      %v753 = vunpack.c.l.b16 %v657
      %v754 = vunpack.c.l.b16 %v658
      %v755 = vunpack.c.l.b16 %v659
      %v756 = vunpack.c.l.b16 %v660
      %v757 = vunpack.c.l.b16 %v661
      %v758 = vunpack.c.l.b16 %v662
      %v759 = vunpack.c.l.b16 %v663
      %v760 = vunpack.c.l.b16 %v664
      %v761 = vunpack.c.l.b16 %v665
      %v762 = vunpack.c.l.b16 %v666
      %v763 = vunpack.c.l.b16 %v667
      %v764 = vunpack.c.l.b16 %v668
      %v765 = vunpack.c.l.b16 %v669
      %v766 = vunpack.c.l.b16 %v670
      %v767 = vunpack.c.l.b16 %v671
      %v768 = vunpack.c.l.b16 %v672
      %v769 = vunpack.c.l.b16 %v673
      %v770 = vunpack.c.l.b16 %v674
      %v771 = vunpack.c.l.b16 %v675
      %v772 = vunpack.c.l.b16 %v676
      %v773 = vunpack.c.l.b16 %v677
      %v774 = vunpack.c.l.b16 %v678
      %v775 = vunpack.c.l.b16 %v679
      %v776 = vunpack.c.l.b16 %v680
      %v777 = vunpack.c.l.b16 %v681
      %v778 = vunpack.c.l.b16 %v682
      %v779 = vunpack.c.l.b16 %v683
      %v780 = vunpack.c.l.b16 %v684
      %v781 = vunpack.c.l.b16 %v685
      %v782 = vunpack.c.l.b16 %v686
      %v783 = vunpack.c.l.b16 %v687
      %v784 = vunpack.c.l.b16 %v688
      %v785 = vunpack.c.l.b16 %v689
      %v786 = vunpack.c.l.b16 %v690
      %v787 = vunpack.c.l.b16 %v691
      %v788 = vunpack.c.l.b16 %v692
      %v789 = vunpack.c.l.b16 %v693
      %v790 = vunpack.c.l.b16 %v694
      %v791 = vunpack.c.l.b16 %v695
      %v792 = vunpack.c.l.b16 %v696
      %v793 = vunpack.c.l.b16 %v697
      %v794 = vunpack.c.l.b16 %v698
      %v795 = vunpack.c.l.b16 %v699
      %v796 = vunpack.c.l.b16 %v700
      %v797 = vunpack.c.l.b16 %v701
      %v798 = vpack.c.b16 %v751, %v750
      %v799 = vpack.c.b16 %v753, %v752
      %v800 = vpack.c.b16 %v755, %v754
      %v801 = vpack.c.b16 %v757, %v756
      %v802 = vpack.c.b16 %v759, %v758
      %v803 = vpack.c.b16 %v761, %v760
      %v804 = vpack.c.b16 %v763, %v762
      %v805 = vpack.c.b16 %v765, %v764
      %v806 = vpack.c.b16 %v767, %v766
      %v807 = vpack.c.b16 %v769, %v768
      %v808 = vpack.c.b16 %v771, %v770
      %v809 = vpack.c.b16 %v773, %v772
      %v810 = vpack.c.b16 %v775, %v774
      %v811 = vpack.c.b16 %v777, %v776
      %v812 = vpack.c.b16 %v779, %v778
      %v813 = vpack.c.b16 %v781, %v780
      %v814 = vpack.c.b16 %v783, %v782
      %v815 = vpack.c.b16 %v785, %v784
      %v816 = vpack.c.b16 %v787, %v786
      %v817 = vpack.c.b16 %v789, %v788
      %v818 = vpack.c.b16 %v791, %v790
      %v819 = vpack.c.b16 %v793, %v792
      %v820 = vpack.c.b16 %v795, %v794
      %v821 = vpack.c.b16 %v797, %v796
      %846 = vmatpush.bf16.msra.mxu0 %v805
      %847 = vmatpush.bf16.msra.mxu0 %v804
      %848 = vmatpush.bf16.msra.mxu0 %v803
      %849 = vmatpush.bf16.msra.mxu0 %v802
      %850 = vmatpush.bf16.msra.mxu0 %v801
      %851 = vmatpush.bf16.msra.mxu0 %v800
      %852 = vmatpush.bf16.msra.mxu0 %v799
      %853 = vmatpush.bf16.msra.mxu0 %v798
      %854 = vmatmul.bf16.gmra.mxu0 %v384
      %v855 = vpop.f32.mrf.mxu0
      %v856 = vadd.f32 0.0, %v855
      %v857 = vpop.f32.mrf.mxu0
      %v858 = vadd.f32 0.0, %v857
      %859 = vmatmul.bf16.gmra.mxu0 %v385
      %v860 = vpop.f32.mrf.mxu0
      %v861 = vadd.f32 0.0, %v860
      %v862 = vpop.f32.mrf.mxu0
      %v863 = vadd.f32 0.0, %v862
      %864 = vmatmul.bf16.gmra.mxu0 %v386
      %v865 = vpop.f32.mrf.mxu0
      %v866 = vadd.f32 0.0, %v865
      %v867 = vpop.f32.mrf.mxu0
      %v868 = vadd.f32 0.0, %v867
      %869 = vmatmul.bf16.gmra.mxu0 %v387
      %v870 = vpop.f32.mrf.mxu0
      %v871 = vadd.f32 0.0, %v870
      %v872 = vpop.f32.mrf.mxu0
      %v873 = vadd.f32 0.0, %v872
      %874 = vmatmul.bf16.gmra.mxu0 %v388
      %v875 = vpop.f32.mrf.mxu0
      %v876 = vadd.f32 0.0, %v875
      %v877 = vpop.f32.mrf.mxu0
      %v878 = vadd.f32 0.0, %v877
      %879 = vmatmul.bf16.gmra.mxu0 %v389
      %v880 = vpop.f32.mrf.mxu0
      %v881 = vadd.f32 0.0, %v880
      %v882 = vpop.f32.mrf.mxu0
      %v883 = vadd.f32 0.0, %v882
      %884 = vmatmul.bf16.gmra.mxu0 %v390
      %v885 = vpop.f32.mrf.mxu0
      %v886 = vadd.f32 0.0, %v885
      %v887 = vpop.f32.mrf.mxu0
      %v888 = vadd.f32 0.0, %v887
      %889 = vmatmul.bf16.gmra.mxu0 %v391
      %v890 = vpop.f32.mrf.mxu0
      %v891 = vadd.f32 0.0, %v890
      %v892 = vpop.f32.mrf.mxu0
      %v893 = vadd.f32 0.0, %v892
      %894 = vmatmul.bf16.gmra.mxu0 %v392
      %v895 = vpop.f32.mrf.mxu0
      %v896 = vadd.f32 0.0, %v895
      %v897 = vpop.f32.mrf.mxu0
      %v898 = vadd.f32 0.0, %v897
      %899 = vmatmul.bf16.gmra.mxu0 %v393
      %v900 = vpop.f32.mrf.mxu0
      %v901 = vadd.f32 0.0, %v900
      %v902 = vpop.f32.mrf.mxu0
      %v903 = vadd.f32 0.0, %v902
      %904 = vdwg.mxu0
      %905 = vmatpush.bf16.msra.mxu0 %v813
      %906 = vmatpush.bf16.msra.mxu0 %v812
      %907 = vmatpush.bf16.msra.mxu0 %v811
      %908 = vmatpush.bf16.msra.mxu0 %v810
      %909 = vmatpush.bf16.msra.mxu0 %v809
      %910 = vmatpush.bf16.msra.mxu0 %v808
      %911 = vmatpush.bf16.msra.mxu0 %v807
      %912 = vmatpush.bf16.msra.mxu0 %v806
      %913 = vmatmul.bf16.gmra.mxu0 %v456
      %v914 = vpop.f32.mrf.mxu0
      %v915 = vadd.f32 %v856, %v914
      %v916 = vpop.f32.mrf.mxu0
      %v917 = vadd.f32 %v858, %v916
      %918 = vmatmul.bf16.gmra.mxu0 %v468
      %v919 = vpop.f32.mrf.mxu0
      %v920 = vadd.f32 %v861, %v919
      %v921 = vpop.f32.mrf.mxu0
      %v922 = vadd.f32 %v863, %v921
      %923 = vmatmul.bf16.gmra.mxu0 %v480
      %v924 = vpop.f32.mrf.mxu0
      %v925 = vadd.f32 %v866, %v924
      %v926 = vpop.f32.mrf.mxu0
      %v927 = vadd.f32 %v868, %v926
      %928 = vmatmul.bf16.gmra.mxu0 %v492
      %v929 = vpop.f32.mrf.mxu0
      %v930 = vadd.f32 %v871, %v929
      %v931 = vpop.f32.mrf.mxu0
      %v932 = vadd.f32 %v873, %v931
      %933 = vmatmul.bf16.gmra.mxu0 %v504
      %v934 = vpop.f32.mrf.mxu0
      %v935 = vadd.f32 %v876, %v934
      %v936 = vpop.f32.mrf.mxu0
      %v937 = vadd.f32 %v878, %v936
      %938 = vmatmul.bf16.gmra.mxu0 %v516
      %v939 = vpop.f32.mrf.mxu0
      %v940 = vadd.f32 %v881, %v939
      %v941 = vpop.f32.mrf.mxu0
      %v942 = vadd.f32 %v883, %v941
      %943 = vmatmul.bf16.gmra.mxu0 %v528
      %v944 = vpop.f32.mrf.mxu0
      %v945 = vadd.f32 %v886, %v944
      %v946 = vpop.f32.mrf.mxu0
      %v947 = vadd.f32 %v888, %v946
      %948 = vmatmul.bf16.gmra.mxu0 %v540
      %v949 = vpop.f32.mrf.mxu0
      %v950 = vadd.f32 %v891, %v949
      %v951 = vpop.f32.mrf.mxu0
      %v952 = vadd.f32 %v893, %v951
      %953 = vmatmul.bf16.gmra.mxu0 %v552
      %v954 = vpop.f32.mrf.mxu0
      %v955 = vadd.f32 %v896, %v954
      %v956 = vpop.f32.mrf.mxu0
      %v957 = vadd.f32 %v898, %v956
      %958 = vmatmul.bf16.gmra.mxu0 %v564
      %v959 = vpop.f32.mrf.mxu0
      %v960 = vadd.f32 %v901, %v959
      %v961 = vpop.f32.mrf.mxu0
      %v962 = vadd.f32 %v903, %v961
      %963 = vdwg.mxu0
      %964 = vmatpush.bf16.msra.mxu0 %v821
      %965 = vmatpush.bf16.msra.mxu0 %v820
      %966 = vmatpush.bf16.msra.mxu0 %v819
      %967 = vmatpush.bf16.msra.mxu0 %v818
      %968 = vmatpush.bf16.msra.mxu0 %v817
      %969 = vmatpush.bf16.msra.mxu0 %v816
      %970 = vmatpush.bf16.msra.mxu0 %v815
      %971 = vmatpush.bf16.msra.mxu0 %v814
      %972 = vmatmul.bf16.gmra.mxu0 %v604
      %v973 = vpop.f32.mrf.mxu0
      %v974 = vadd.f32 %v915, %v973
      %v975 = vpop.f32.mrf.mxu0
      %v976 = vadd.f32 %v917, %v975
      %977 = vmatmul.bf16.gmra.mxu0 %v607
      %v978 = vpop.f32.mrf.mxu0
      %v979 = vadd.f32 %v920, %v978
      %v980 = vpop.f32.mrf.mxu0
      %v981 = vadd.f32 %v922, %v980
      %982 = vmatmul.bf16.gmra.mxu0 %v610
      %v983 = vpop.f32.mrf.mxu0
      %v984 = vadd.f32 %v925, %v983
      %v985 = vpop.f32.mrf.mxu0
      %v986 = vadd.f32 %v927, %v985
      %987 = vmatmul.bf16.gmra.mxu0 %v613
      %v988 = vpop.f32.mrf.mxu0
      %v989 = vadd.f32 %v930, %v988
      %v990 = vpop.f32.mrf.mxu0
      %v991 = vadd.f32 %v932, %v990
      %992 = vmatmul.bf16.gmra.mxu0 %v616
      %v993 = vpop.f32.mrf.mxu0
      %v994 = vadd.f32 %v935, %v993
      %v995 = vpop.f32.mrf.mxu0
      %v996 = vadd.f32 %v937, %v995
      %997 = vmatmul.bf16.gmra.mxu0 %v619
      %v998 = vpop.f32.mrf.mxu0
      %v999 = vadd.f32 %v940, %v998
      %v1000 = vpop.f32.mrf.mxu0
      %v1001 = vadd.f32 %v942, %v1000
      %1002 = vmatmul.bf16.gmra.mxu0 %v622
      %v1003 = vpop.f32.mrf.mxu0
      %v1004 = vadd.f32 %v945, %v1003
      %v1005 = vpop.f32.mrf.mxu0
      %v1006 = vadd.f32 %v947, %v1005
      %1007 = vmatmul.bf16.gmra.mxu0 %v625
      %v1008 = vpop.f32.mrf.mxu0
      %v1009 = vadd.f32 %v950, %v1008
      %v1010 = vpop.f32.mrf.mxu0
      %v1011 = vadd.f32 %v952, %v1010
      %1012 = vmatmul.bf16.gmra.mxu0 %v628
      %v1013 = vpop.f32.mrf.mxu0
      %v1014 = vadd.f32 %v955, %v1013
      %v1015 = vpop.f32.mrf.mxu0
      %v1016 = vadd.f32 %v957, %v1015
      %1017 = vmatmul.bf16.gmra.mxu0 %v631
      %v1018 = vpop.f32.mrf.mxu0
      %v1019 = vadd.f32 %v960, %v1018
      %v1020 = vpop.f32.mrf.mxu0
      %v1021 = vadd.f32 %v962, %v1020
      %1022 = vdwg.mxu0
      %v1023 = vadd.f32 %v652, %v974
      %v1024 = vadd.f32 %v652, %v976
      %v1025 = vadd.f32 %v652, %v979
      %v1026 = vadd.f32 %v652, %v981
      %v1027 = vadd.f32 %v652, %v984
      %v1028 = vadd.f32 %v652, %v986
      %v1029 = vadd.f32 %v652, %v989
      %v1030 = vadd.f32 %v652, %v991
      %v1031 = vadd.f32 %v652, %v994
      %v1032 = vadd.f32 %v652, %v996
      %v1033 = vadd.f32 %v652, %v999
      %v1034 = vadd.f32 %v652, %v1001
      %v1035 = vadd.f32 %v652, %v1004
      %v1036 = vadd.f32 %v652, %v1006
      %v1037 = vadd.f32 %v652, %v1009
      %v1038 = vadd.f32 %v652, %v1011
      %v1039 = vadd.f32 %v652, %v1014
      %v1040 = vadd.f32 %v652, %v1016
      %v1041 = vadd.f32 %v652, %v1019
      %v1042 = vadd.f32 %v652, %v1021
      %s1043 = scalar_lea.vmem %s1, 192
      %v1044 = vld [vmem:[%s1043] sm:$0xf]
      %v1045 = vld [vmem:[%s1043 + $0x4] sm:$0xf]
      %v1046 = vld [vmem:[%s1043 + $0x8] sm:$0xf]
      %v1047 = vld [vmem:[%s1043 + $0xc] sm:$0xf]
      %v1048 = vld [vmem:[%s1043 + $0x10] sm:$0xf]
      %v1049 = vld [vmem:[%s1043 + $0x14] sm:$0xf]
      %v1050 = vld [vmem:[%s1043 + $0x18] sm:$0xf]
      %v1051 = vld [vmem:[%s1043 + $0x1c] sm:$0xf]
      %v1052 = vld [vmem:[%s1043 + $0x20] sm:$0xf]
      %v1053 = vld [vmem:[%s1043 + $0x24] sm:$0xf]
      %v1054 = vld [vmem:[%s1043 + $0x28] sm:$0xf]
      %v1055 = vld [vmem:[%s1043 + $0x2c] sm:$0xf]
      %v1056 = vld [vmem:[%s1043 + $0x30] sm:$0xf]
      %v1057 = vld [vmem:[%s1043 + $0x34] sm:$0xf]
      %v1058 = vld [vmem:[%s1043 + $0x38] sm:$0xf]
      %v1059 = vld [vmem:[%s1043 + $0x3c] sm:$0xf]
      %v1060 = vld [vmem:[%s1043 + $0x40] sm:$0xf]
      %v1061 = vld [vmem:[%s1043 + $0x44] sm:$0xf]
      %v1062 = vld [vmem:[%s1043 + $0x48] sm:$0xf]
      %v1063 = vld [vmem:[%s1043 + $0x4c] sm:$0xf]
      %v1064 = vld [vmem:[%s1043 + $0x50] sm:$0xf]
      %v1065 = vld [vmem:[%s1043 + $0x54] sm:$0xf]
      %v1066 = vld [vmem:[%s1043 + $0x58] sm:$0xf]
      %v1067 = vld [vmem:[%s1043 + $0x5c] sm:$0xf]
      %v1068 = vld [vmem:[%s1043 + $0x60] sm:$0xf]
      %v1069 = vld [vmem:[%s1043 + $0x64] sm:$0xf]
      %v1070 = vld [vmem:[%s1043 + $0x68] sm:$0xf]
      %v1071 = vld [vmem:[%s1043 + $0x6c] sm:$0xf]
      %v1072 = vld [vmem:[%s1043 + $0x70] sm:$0xf]
      %v1073 = vld [vmem:[%s1043 + $0x74] sm:$0xf]
      %v1074 = vld [vmem:[%s1043 + $0x78] sm:$0xf]
      %v1075 = vld [vmem:[%s1043 + $0x7c] sm:$0xf]
      %v1076 = vld [vmem:[%s1043 + $0x80] sm:$0xf]
      %v1077 = vld [vmem:[%s1043 + $0x84] sm:$0xf]
      %v1078 = vld [vmem:[%s1043 + $0x88] sm:$0xf]
      %v1079 = vld [vmem:[%s1043 + $0x8c] sm:$0xf]
      %v1080 = vld [vmem:[%s1043 + $0x90] sm:$0xf]
      %v1081 = vld [vmem:[%s1043 + $0x94] sm:$0xf]
      %v1082 = vld [vmem:[%s1043 + $0x98] sm:$0xf]
      %v1083 = vld [vmem:[%s1043 + $0x9c] sm:$0xf]
      %v1084 = vld [vmem:[%s1043 + $0xa0] sm:$0xf]
      %v1085 = vld [vmem:[%s1043 + $0xa4] sm:$0xf]
      %v1086 = vld [vmem:[%s1043 + $0xa8] sm:$0xf]
      %v1087 = vld [vmem:[%s1043 + $0xac] sm:$0xf]
      %v1088 = vld [vmem:[%s1043 + $0xb0] sm:$0xf]
      %v1089 = vld [vmem:[%s1043 + $0xb4] sm:$0xf]
      %v1090 = vld [vmem:[%s1043 + $0xb8] sm:$0xf]
      %v1091 = vld [vmem:[%s1043 + $0xbc] sm:$0xf]
      %v1140 = vunpack.c.l.b16 %v1044
      %v1141 = vunpack.c.l.b16 %v1045
      %v1142 = vunpack.c.l.b16 %v1046
      %v1143 = vunpack.c.l.b16 %v1047
      %v1144 = vunpack.c.l.b16 %v1048
      %v1145 = vunpack.c.l.b16 %v1049
      %v1146 = vunpack.c.l.b16 %v1050
      %v1147 = vunpack.c.l.b16 %v1051
      %v1148 = vunpack.c.l.b16 %v1052
      %v1149 = vunpack.c.l.b16 %v1053
      %v1150 = vunpack.c.l.b16 %v1054
      %v1151 = vunpack.c.l.b16 %v1055
      %v1152 = vunpack.c.l.b16 %v1056
      %v1153 = vunpack.c.l.b16 %v1057
      %v1154 = vunpack.c.l.b16 %v1058
      %v1155 = vunpack.c.l.b16 %v1059
      %v1156 = vunpack.c.l.b16 %v1060
      %v1157 = vunpack.c.l.b16 %v1061
      %v1158 = vunpack.c.l.b16 %v1062
      %v1159 = vunpack.c.l.b16 %v1063
      %v1160 = vunpack.c.l.b16 %v1064
      %v1161 = vunpack.c.l.b16 %v1065
      %v1162 = vunpack.c.l.b16 %v1066
      %v1163 = vunpack.c.l.b16 %v1067
      %v1164 = vunpack.c.l.b16 %v1068
      %v1165 = vunpack.c.l.b16 %v1069
      %v1166 = vunpack.c.l.b16 %v1070
      %v1167 = vunpack.c.l.b16 %v1071
      %v1168 = vunpack.c.l.b16 %v1072
      %v1169 = vunpack.c.l.b16 %v1073
      %v1170 = vunpack.c.l.b16 %v1074
      %v1171 = vunpack.c.l.b16 %v1075
      %v1172 = vunpack.c.l.b16 %v1076
      %v1173 = vunpack.c.l.b16 %v1077
      %v1174 = vunpack.c.l.b16 %v1078
      %v1175 = vunpack.c.l.b16 %v1079
      %v1176 = vunpack.c.l.b16 %v1080
      %v1177 = vunpack.c.l.b16 %v1081
      %v1178 = vunpack.c.l.b16 %v1082
      %v1179 = vunpack.c.l.b16 %v1083
      %v1180 = vunpack.c.l.b16 %v1084
      %v1181 = vunpack.c.l.b16 %v1085
      %v1182 = vunpack.c.l.b16 %v1086
      %v1183 = vunpack.c.l.b16 %v1087
      %v1184 = vunpack.c.l.b16 %v1088
      %v1185 = vunpack.c.l.b16 %v1089
      %v1186 = vunpack.c.l.b16 %v1090
      %v1187 = vunpack.c.l.b16 %v1091
      %v1188 = vpack.c.b16 %v1141, %v1140
      %v1189 = vpack.c.b16 %v1143, %v1142
      %v1190 = vpack.c.b16 %v1145, %v1144
      %v1191 = vpack.c.b16 %v1147, %v1146
      %v1192 = vpack.c.b16 %v1149, %v1148
      %v1193 = vpack.c.b16 %v1151, %v1150
      %v1194 = vpack.c.b16 %v1153, %v1152
      %v1195 = vpack.c.b16 %v1155, %v1154
      %v1196 = vpack.c.b16 %v1157, %v1156
      %v1197 = vpack.c.b16 %v1159, %v1158
      %v1198 = vpack.c.b16 %v1161, %v1160
      %v1199 = vpack.c.b16 %v1163, %v1162
      %v1200 = vpack.c.b16 %v1165, %v1164
      %v1201 = vpack.c.b16 %v1167, %v1166
      %v1202 = vpack.c.b16 %v1169, %v1168
      %v1203 = vpack.c.b16 %v1171, %v1170
      %v1204 = vpack.c.b16 %v1173, %v1172
      %v1205 = vpack.c.b16 %v1175, %v1174
      %v1206 = vpack.c.b16 %v1177, %v1176
      %v1207 = vpack.c.b16 %v1179, %v1178
      %v1208 = vpack.c.b16 %v1181, %v1180
      %v1209 = vpack.c.b16 %v1183, %v1182
      %v1210 = vpack.c.b16 %v1185, %v1184
      %v1211 = vpack.c.b16 %v1187, %v1186
      %1236 = vmatpush.bf16.msra.mxu0 %v1195
      %1237 = vmatpush.bf16.msra.mxu0 %v1194
      %1238 = vmatpush.bf16.msra.mxu0 %v1193
      %1239 = vmatpush.bf16.msra.mxu0 %v1192
      %1240 = vmatpush.bf16.msra.mxu0 %v1191
      %1241 = vmatpush.bf16.msra.mxu0 %v1190
      %1242 = vmatpush.bf16.msra.mxu0 %v1189
      %1243 = vmatpush.bf16.msra.mxu0 %v1188
      %1244 = vmatmul.bf16.gmra.mxu0 %v385
      %v1245 = vpop.f32.mrf.mxu0
      %v1246 = vadd.f32 0.0, %v1245
      %v1247 = vpop.f32.mrf.mxu0
      %v1248 = vadd.f32 0.0, %v1247
      %1249 = vmatmul.bf16.gmra.mxu0 %v386
      %v1250 = vpop.f32.mrf.mxu0
      %v1251 = vadd.f32 0.0, %v1250
      %v1252 = vpop.f32.mrf.mxu0
      %v1253 = vadd.f32 0.0, %v1252
      %1254 = vmatmul.bf16.gmra.mxu0 %v387
      %v1255 = vpop.f32.mrf.mxu0
      %v1256 = vadd.f32 0.0, %v1255
      %v1257 = vpop.f32.mrf.mxu0
      %v1258 = vadd.f32 0.0, %v1257
      %1259 = vmatmul.bf16.gmra.mxu0 %v388
      %v1260 = vpop.f32.mrf.mxu0
      %v1261 = vadd.f32 0.0, %v1260
      %v1262 = vpop.f32.mrf.mxu0
      %v1263 = vadd.f32 0.0, %v1262
      %1264 = vmatmul.bf16.gmra.mxu0 %v389
      %v1265 = vpop.f32.mrf.mxu0
      %v1266 = vadd.f32 0.0, %v1265
      %v1267 = vpop.f32.mrf.mxu0
      %v1268 = vadd.f32 0.0, %v1267
      %1269 = vmatmul.bf16.gmra.mxu0 %v390
      %v1270 = vpop.f32.mrf.mxu0
      %v1271 = vadd.f32 0.0, %v1270
      %v1272 = vpop.f32.mrf.mxu0
      %v1273 = vadd.f32 0.0, %v1272
      %1274 = vmatmul.bf16.gmra.mxu0 %v391
      %v1275 = vpop.f32.mrf.mxu0
      %v1276 = vadd.f32 0.0, %v1275
      %v1277 = vpop.f32.mrf.mxu0
      %v1278 = vadd.f32 0.0, %v1277
      %1279 = vmatmul.bf16.gmra.mxu0 %v392
      %v1280 = vpop.f32.mrf.mxu0
      %v1281 = vadd.f32 0.0, %v1280
      %v1282 = vpop.f32.mrf.mxu0
      %v1283 = vadd.f32 0.0, %v1282
      %1284 = vmatmul.bf16.gmra.mxu0 %v393
      %v1285 = vpop.f32.mrf.mxu0
      %v1286 = vadd.f32 0.0, %v1285
      %v1287 = vpop.f32.mrf.mxu0
      %v1288 = vadd.f32 0.0, %v1287
      %1289 = vmatmul.bf16.gmra.mxu0 %v394
      %v1290 = vpop.f32.mrf.mxu0
      %v1291 = vadd.f32 0.0, %v1290
      %v1292 = vpop.f32.mrf.mxu0
      %v1293 = vadd.f32 0.0, %v1292
      %1294 = vdwg.mxu0
      %1295 = vmatpush.bf16.msra.mxu0 %v1203
      %1296 = vmatpush.bf16.msra.mxu0 %v1202
      %1297 = vmatpush.bf16.msra.mxu0 %v1201
      %1298 = vmatpush.bf16.msra.mxu0 %v1200
      %1299 = vmatpush.bf16.msra.mxu0 %v1199
      %1300 = vmatpush.bf16.msra.mxu0 %v1198
      %1301 = vmatpush.bf16.msra.mxu0 %v1197
      %1302 = vmatpush.bf16.msra.mxu0 %v1196
      %1303 = vmatmul.bf16.gmra.mxu0 %v468
      %v1304 = vpop.f32.mrf.mxu0
      %v1305 = vadd.f32 %v1246, %v1304
      %v1306 = vpop.f32.mrf.mxu0
      %v1307 = vadd.f32 %v1248, %v1306
      %1308 = vmatmul.bf16.gmra.mxu0 %v480
      %v1309 = vpop.f32.mrf.mxu0
      %v1310 = vadd.f32 %v1251, %v1309
      %v1311 = vpop.f32.mrf.mxu0
      %v1312 = vadd.f32 %v1253, %v1311
      %1313 = vmatmul.bf16.gmra.mxu0 %v492
      %v1314 = vpop.f32.mrf.mxu0
      %v1315 = vadd.f32 %v1256, %v1314
      %v1316 = vpop.f32.mrf.mxu0
      %v1317 = vadd.f32 %v1258, %v1316
      %1318 = vmatmul.bf16.gmra.mxu0 %v504
      %v1319 = vpop.f32.mrf.mxu0
      %v1320 = vadd.f32 %v1261, %v1319
      %v1321 = vpop.f32.mrf.mxu0
      %v1322 = vadd.f32 %v1263, %v1321
      %1323 = vmatmul.bf16.gmra.mxu0 %v516
      %v1324 = vpop.f32.mrf.mxu0
      %v1325 = vadd.f32 %v1266, %v1324
      %v1326 = vpop.f32.mrf.mxu0
      %v1327 = vadd.f32 %v1268, %v1326
      %1328 = vmatmul.bf16.gmra.mxu0 %v528
      %v1329 = vpop.f32.mrf.mxu0
      %v1330 = vadd.f32 %v1271, %v1329
      %v1331 = vpop.f32.mrf.mxu0
      %v1332 = vadd.f32 %v1273, %v1331
      %1333 = vmatmul.bf16.gmra.mxu0 %v540
      %v1334 = vpop.f32.mrf.mxu0
      %v1335 = vadd.f32 %v1276, %v1334
      %v1336 = vpop.f32.mrf.mxu0
      %v1337 = vadd.f32 %v1278, %v1336
      %1338 = vmatmul.bf16.gmra.mxu0 %v552
      %v1339 = vpop.f32.mrf.mxu0
      %v1340 = vadd.f32 %v1281, %v1339
      %v1341 = vpop.f32.mrf.mxu0
      %v1342 = vadd.f32 %v1283, %v1341
      %1343 = vmatmul.bf16.gmra.mxu0 %v564
      %v1344 = vpop.f32.mrf.mxu0
      %v1345 = vadd.f32 %v1286, %v1344
      %v1346 = vpop.f32.mrf.mxu0
      %v1347 = vadd.f32 %v1288, %v1346
      %1348 = vmatmul.bf16.gmra.mxu0 %v576
      %v1349 = vpop.f32.mrf.mxu0
      %v1350 = vadd.f32 %v1291, %v1349
      %v1351 = vpop.f32.mrf.mxu0
      %v1352 = vadd.f32 %v1293, %v1351
      %1353 = vdwg.mxu0
      %1354 = vmatpush.bf16.msra.mxu0 %v1211
      %1355 = vmatpush.bf16.msra.mxu0 %v1210
      %1356 = vmatpush.bf16.msra.mxu0 %v1209
      %1357 = vmatpush.bf16.msra.mxu0 %v1208
      %1358 = vmatpush.bf16.msra.mxu0 %v1207
      %1359 = vmatpush.bf16.msra.mxu0 %v1206
      %1360 = vmatpush.bf16.msra.mxu0 %v1205
      %1361 = vmatpush.bf16.msra.mxu0 %v1204
      %1362 = vmatmul.bf16.gmra.mxu0 %v607
      %v1363 = vpop.f32.mrf.mxu0
      %v1364 = vadd.f32 %v1305, %v1363
      %v1365 = vpop.f32.mrf.mxu0
      %v1366 = vadd.f32 %v1307, %v1365
      %1367 = vmatmul.bf16.gmra.mxu0 %v610
      %v1368 = vpop.f32.mrf.mxu0
      %v1369 = vadd.f32 %v1310, %v1368
      %v1370 = vpop.f32.mrf.mxu0
      %v1371 = vadd.f32 %v1312, %v1370
      %1372 = vmatmul.bf16.gmra.mxu0 %v613
      %v1373 = vpop.f32.mrf.mxu0
      %v1374 = vadd.f32 %v1315, %v1373
      %v1375 = vpop.f32.mrf.mxu0
      %v1376 = vadd.f32 %v1317, %v1375
      %1377 = vmatmul.bf16.gmra.mxu0 %v616
      %v1378 = vpop.f32.mrf.mxu0
      %v1379 = vadd.f32 %v1320, %v1378
      %v1380 = vpop.f32.mrf.mxu0
      %v1381 = vadd.f32 %v1322, %v1380
      %1382 = vmatmul.bf16.gmra.mxu0 %v619
      %v1383 = vpop.f32.mrf.mxu0
      %v1384 = vadd.f32 %v1325, %v1383
      %v1385 = vpop.f32.mrf.mxu0
      %v1386 = vadd.f32 %v1327, %v1385
      %1387 = vmatmul.bf16.gmra.mxu0 %v622
      %v1388 = vpop.f32.mrf.mxu0
      %v1389 = vadd.f32 %v1330, %v1388
      %v1390 = vpop.f32.mrf.mxu0
      %v1391 = vadd.f32 %v1332, %v1390
      %1392 = vmatmul.bf16.gmra.mxu0 %v625
      %v1393 = vpop.f32.mrf.mxu0
      %v1394 = vadd.f32 %v1335, %v1393
      %v1395 = vpop.f32.mrf.mxu0
      %v1396 = vadd.f32 %v1337, %v1395
      %1397 = vmatmul.bf16.gmra.mxu0 %v628
      %v1398 = vpop.f32.mrf.mxu0
      %v1399 = vadd.f32 %v1340, %v1398
      %v1400 = vpop.f32.mrf.mxu0
      %v1401 = vadd.f32 %v1342, %v1400
      %1402 = vmatmul.bf16.gmra.mxu0 %v631
      %v1403 = vpop.f32.mrf.mxu0
      %v1404 = vadd.f32 %v1345, %v1403
      %v1405 = vpop.f32.mrf.mxu0
      %v1406 = vadd.f32 %v1347, %v1405
      %1407 = vmatmul.bf16.gmra.mxu0 %v634
      %v1408 = vpop.f32.mrf.mxu0
      %v1409 = vadd.f32 %v1350, %v1408
      %v1410 = vpop.f32.mrf.mxu0
      %v1411 = vadd.f32 %v1352, %v1410
      %1412 = vdwg.mxu0
      %v1413 = vadd.f32 %v1023, %v1364
      %v1414 = vadd.f32 %v1024, %v1366
      %v1415 = vadd.f32 %v1025, %v1369
      %v1416 = vadd.f32 %v1026, %v1371
      %v1417 = vadd.f32 %v1027, %v1374
      %v1418 = vadd.f32 %v1028, %v1376
      %v1419 = vadd.f32 %v1029, %v1379
      %v1420 = vadd.f32 %v1030, %v1381
      %v1421 = vadd.f32 %v1031, %v1384
      %v1422 = vadd.f32 %v1032, %v1386
      %v1423 = vadd.f32 %v1033, %v1389
      %v1424 = vadd.f32 %v1034, %v1391
      %v1425 = vadd.f32 %v1035, %v1394
      %v1426 = vadd.f32 %v1036, %v1396
      %v1427 = vadd.f32 %v1037, %v1399
      %v1428 = vadd.f32 %v1038, %v1401
      %v1429 = vadd.f32 %v1039, %v1404
      %v1430 = vadd.f32 %v1040, %v1406
      %v1431 = vadd.f32 %v1041, %v1409
      %v1432 = vadd.f32 %v1042, %v1411
      %s1433 = scalar_lea.vmem %s1, 384
      %v1434 = vld [vmem:[%s1433] sm:$0xf]
      %v1435 = vld [vmem:[%s1433 + $0x4] sm:$0xf]
      %v1436 = vld [vmem:[%s1433 + $0x8] sm:$0xf]
      %v1437 = vld [vmem:[%s1433 + $0xc] sm:$0xf]
      %v1438 = vld [vmem:[%s1433 + $0x10] sm:$0xf]
      %v1439 = vld [vmem:[%s1433 + $0x14] sm:$0xf]
      %v1440 = vld [vmem:[%s1433 + $0x18] sm:$0xf]
      %v1441 = vld [vmem:[%s1433 + $0x1c] sm:$0xf]
      %v1442 = vld [vmem:[%s1433 + $0x20] sm:$0xf]
      %v1443 = vld [vmem:[%s1433 + $0x24] sm:$0xf]
      %v1444 = vld [vmem:[%s1433 + $0x28] sm:$0xf]
      %v1445 = vld [vmem:[%s1433 + $0x2c] sm:$0xf]
      %v1446 = vld [vmem:[%s1433 + $0x30] sm:$0xf]
      %v1447 = vld [vmem:[%s1433 + $0x34] sm:$0xf]
      %v1448 = vld [vmem:[%s1433 + $0x38] sm:$0xf]
      %v1449 = vld [vmem:[%s1433 + $0x3c] sm:$0xf]
      %v1450 = vld [vmem:[%s1433 + $0x40] sm:$0xf]
      %v1451 = vld [vmem:[%s1433 + $0x44] sm:$0xf]
      %v1452 = vld [vmem:[%s1433 + $0x48] sm:$0xf]
      %v1453 = vld [vmem:[%s1433 + $0x4c] sm:$0xf]
      %v1454 = vld [vmem:[%s1433 + $0x50] sm:$0xf]
      %v1455 = vld [vmem:[%s1433 + $0x54] sm:$0xf]
      %v1456 = vld [vmem:[%s1433 + $0x58] sm:$0xf]
      %v1457 = vld [vmem:[%s1433 + $0x5c] sm:$0xf]
      %v1458 = vld [vmem:[%s1433 + $0x60] sm:$0xf]
      %v1459 = vld [vmem:[%s1433 + $0x64] sm:$0xf]
      %v1460 = vld [vmem:[%s1433 + $0x68] sm:$0xf]
      %v1461 = vld [vmem:[%s1433 + $0x6c] sm:$0xf]
      %v1462 = vld [vmem:[%s1433 + $0x70] sm:$0xf]
      %v1463 = vld [vmem:[%s1433 + $0x74] sm:$0xf]
      %v1464 = vld [vmem:[%s1433 + $0x78] sm:$0xf]
      %v1465 = vld [vmem:[%s1433 + $0x7c] sm:$0xf]
      %v1466 = vld [vmem:[%s1433 + $0x80] sm:$0xf]
      %v1467 = vld [vmem:[%s1433 + $0x84] sm:$0xf]
      %v1468 = vld [vmem:[%s1433 + $0x88] sm:$0xf]
      %v1469 = vld [vmem:[%s1433 + $0x8c] sm:$0xf]
      %v1470 = vld [vmem:[%s1433 + $0x90] sm:$0xf]
      %v1471 = vld [vmem:[%s1433 + $0x94] sm:$0xf]
      %v1472 = vld [vmem:[%s1433 + $0x98] sm:$0xf]
      %v1473 = vld [vmem:[%s1433 + $0x9c] sm:$0xf]
      %v1474 = vld [vmem:[%s1433 + $0xa0] sm:$0xf]
      %v1475 = vld [vmem:[%s1433 + $0xa4] sm:$0xf]
      %v1476 = vld [vmem:[%s1433 + $0xa8] sm:$0xf]
      %v1477 = vld [vmem:[%s1433 + $0xac] sm:$0xf]
      %v1478 = vld [vmem:[%s1433 + $0xb0] sm:$0xf]
      %v1479 = vld [vmem:[%s1433 + $0xb4] sm:$0xf]
      %v1480 = vld [vmem:[%s1433 + $0xb8] sm:$0xf]
      %v1481 = vld [vmem:[%s1433 + $0xbc] sm:$0xf]
      %v1530 = vunpack.c.l.b16 %v1434
      %v1531 = vunpack.c.l.b16 %v1435
      %v1532 = vunpack.c.l.b16 %v1436
      %v1533 = vunpack.c.l.b16 %v1437
      %v1534 = vunpack.c.l.b16 %v1438
      %v1535 = vunpack.c.l.b16 %v1439
      %v1536 = vunpack.c.l.b16 %v1440
      %v1537 = vunpack.c.l.b16 %v1441
      %v1538 = vunpack.c.l.b16 %v1442
      %v1539 = vunpack.c.l.b16 %v1443
      %v1540 = vunpack.c.l.b16 %v1444
      %v1541 = vunpack.c.l.b16 %v1445
      %v1542 = vunpack.c.l.b16 %v1446
      %v1543 = vunpack.c.l.b16 %v1447
      %v1544 = vunpack.c.l.b16 %v1448
      %v1545 = vunpack.c.l.b16 %v1449
      %v1546 = vunpack.c.l.b16 %v1450
      %v1547 = vunpack.c.l.b16 %v1451
      %v1548 = vunpack.c.l.b16 %v1452
      %v1549 = vunpack.c.l.b16 %v1453
      %v1550 = vunpack.c.l.b16 %v1454
      %v1551 = vunpack.c.l.b16 %v1455
      %v1552 = vunpack.c.l.b16 %v1456
      %v1553 = vunpack.c.l.b16 %v1457
      %v1554 = vunpack.c.l.b16 %v1458
      %v1555 = vunpack.c.l.b16 %v1459
      %v1556 = vunpack.c.l.b16 %v1460
      %v1557 = vunpack.c.l.b16 %v1461
      %v1558 = vunpack.c.l.b16 %v1462
      %v1559 = vunpack.c.l.b16 %v1463
      %v1560 = vunpack.c.l.b16 %v1464
      %v1561 = vunpack.c.l.b16 %v1465
      %v1562 = vunpack.c.l.b16 %v1466
      %v1563 = vunpack.c.l.b16 %v1467
      %v1564 = vunpack.c.l.b16 %v1468
      %v1565 = vunpack.c.l.b16 %v1469
      %v1566 = vunpack.c.l.b16 %v1470
      %v1567 = vunpack.c.l.b16 %v1471
      %v1568 = vunpack.c.l.b16 %v1472
      %v1569 = vunpack.c.l.b16 %v1473
      %v1570 = vunpack.c.l.b16 %v1474
      %v1571 = vunpack.c.l.b16 %v1475
      %v1572 = vunpack.c.l.b16 %v1476
      %v1573 = vunpack.c.l.b16 %v1477
      %v1574 = vunpack.c.l.b16 %v1478
      %v1575 = vunpack.c.l.b16 %v1479
      %v1576 = vunpack.c.l.b16 %v1480
      %v1577 = vunpack.c.l.b16 %v1481
      %v1578 = vpack.c.b16 %v1531, %v1530
      %v1579 = vpack.c.b16 %v1533, %v1532
      %v1580 = vpack.c.b16 %v1535, %v1534
      %v1581 = vpack.c.b16 %v1537, %v1536
      %v1582 = vpack.c.b16 %v1539, %v1538
      %v1583 = vpack.c.b16 %v1541, %v1540
      %v1584 = vpack.c.b16 %v1543, %v1542
      %v1585 = vpack.c.b16 %v1545, %v1544
      %v1586 = vpack.c.b16 %v1547, %v1546
      %v1587 = vpack.c.b16 %v1549, %v1548
      %v1588 = vpack.c.b16 %v1551, %v1550
      %v1589 = vpack.c.b16 %v1553, %v1552
      %v1590 = vpack.c.b16 %v1555, %v1554
      %v1591 = vpack.c.b16 %v1557, %v1556
      %v1592 = vpack.c.b16 %v1559, %v1558
      %v1593 = vpack.c.b16 %v1561, %v1560
      %v1594 = vpack.c.b16 %v1563, %v1562
      %v1595 = vpack.c.b16 %v1565, %v1564
      %v1596 = vpack.c.b16 %v1567, %v1566
      %v1597 = vpack.c.b16 %v1569, %v1568
      %v1598 = vpack.c.b16 %v1571, %v1570
      %v1599 = vpack.c.b16 %v1573, %v1572
      %v1600 = vpack.c.b16 %v1575, %v1574
      %v1601 = vpack.c.b16 %v1577, %v1576
      %1626 = vmatpush.bf16.msra.mxu0 %v1585
      %1627 = vmatpush.bf16.msra.mxu0 %v1584
      %1628 = vmatpush.bf16.msra.mxu0 %v1583
      %1629 = vmatpush.bf16.msra.mxu0 %v1582
      %1630 = vmatpush.bf16.msra.mxu0 %v1581
      %1631 = vmatpush.bf16.msra.mxu0 %v1580
      %1632 = vmatpush.bf16.msra.mxu0 %v1579
      %1633 = vmatpush.bf16.msra.mxu0 %v1578
      %1634 = vmatmul.bf16.gmra.mxu0 %v386
      %v1635 = vpop.f32.mrf.mxu0
      %v1636 = vadd.f32 0.0, %v1635
      %v1637 = vpop.f32.mrf.mxu0
      %v1638 = vadd.f32 0.0, %v1637
      %1639 = vmatmul.bf16.gmra.mxu0 %v387
      %v1640 = vpop.f32.mrf.mxu0
      %v1641 = vadd.f32 0.0, %v1640
      %v1642 = vpop.f32.mrf.mxu0
      %v1643 = vadd.f32 0.0, %v1642
      %1644 = vmatmul.bf16.gmra.mxu0 %v388
      %v1645 = vpop.f32.mrf.mxu0
      %v1646 = vadd.f32 0.0, %v1645
      %v1647 = vpop.f32.mrf.mxu0
      %v1648 = vadd.f32 0.0, %v1647
      %1649 = vmatmul.bf16.gmra.mxu0 %v389
      %v1650 = vpop.f32.mrf.mxu0
      %v1651 = vadd.f32 0.0, %v1650
      %v1652 = vpop.f32.mrf.mxu0
      %v1653 = vadd.f32 0.0, %v1652
      %1654 = vmatmul.bf16.gmra.mxu0 %v390
      %v1655 = vpop.f32.mrf.mxu0
      %v1656 = vadd.f32 0.0, %v1655
      %v1657 = vpop.f32.mrf.mxu0
      %v1658 = vadd.f32 0.0, %v1657
      %1659 = vmatmul.bf16.gmra.mxu0 %v391
      %v1660 = vpop.f32.mrf.mxu0
      %v1661 = vadd.f32 0.0, %v1660
      %v1662 = vpop.f32.mrf.mxu0
      %v1663 = vadd.f32 0.0, %v1662
      %1664 = vmatmul.bf16.gmra.mxu0 %v392
      %v1665 = vpop.f32.mrf.mxu0
      %v1666 = vadd.f32 0.0, %v1665
      %v1667 = vpop.f32.mrf.mxu0
      %v1668 = vadd.f32 0.0, %v1667
      %1669 = vmatmul.bf16.gmra.mxu0 %v393
      %v1670 = vpop.f32.mrf.mxu0
      %v1671 = vadd.f32 0.0, %v1670
      %v1672 = vpop.f32.mrf.mxu0
      %v1673 = vadd.f32 0.0, %v1672
      %1674 = vmatmul.bf16.gmra.mxu0 %v394
      %v1675 = vpop.f32.mrf.mxu0
      %v1676 = vadd.f32 0.0, %v1675
      %v1677 = vpop.f32.mrf.mxu0
      %v1678 = vadd.f32 0.0, %v1677
      %1679 = vmatmul.bf16.gmra.mxu0 %v395
      %v1680 = vpop.f32.mrf.mxu0
      %v1681 = vadd.f32 0.0, %v1680
      %v1682 = vpop.f32.mrf.mxu0
      %v1683 = vadd.f32 0.0, %v1682
      %1684 = vdwg.mxu0
      %1685 = vmatpush.bf16.msra.mxu0 %v1593
      %1686 = vmatpush.bf16.msra.mxu0 %v1592
      %1687 = vmatpush.bf16.msra.mxu0 %v1591
      %1688 = vmatpush.bf16.msra.mxu0 %v1590
      %1689 = vmatpush.bf16.msra.mxu0 %v1589
      %1690 = vmatpush.bf16.msra.mxu0 %v1588
      %1691 = vmatpush.bf16.msra.mxu0 %v1587
      %1692 = vmatpush.bf16.msra.mxu0 %v1586
      %1693 = vmatmul.bf16.gmra.mxu0 %v480
      %v1694 = vpop.f32.mrf.mxu0
      %v1695 = vadd.f32 %v1636, %v1694
      %v1696 = vpop.f32.mrf.mxu0
      %v1697 = vadd.f32 %v1638, %v1696
      %1698 = vmatmul.bf16.gmra.mxu0 %v492
      %v1699 = vpop.f32.mrf.mxu0
      %v1700 = vadd.f32 %v1641, %v1699
      %v1701 = vpop.f32.mrf.mxu0
      %v1702 = vadd.f32 %v1643, %v1701
      %1703 = vmatmul.bf16.gmra.mxu0 %v504
      %v1704 = vpop.f32.mrf.mxu0
      %v1705 = vadd.f32 %v1646, %v1704
      %v1706 = vpop.f32.mrf.mxu0
      %v1707 = vadd.f32 %v1648, %v1706
      %1708 = vmatmul.bf16.gmra.mxu0 %v516
      %v1709 = vpop.f32.mrf.mxu0
      %v1710 = vadd.f32 %v1651, %v1709
      %v1711 = vpop.f32.mrf.mxu0
      %v1712 = vadd.f32 %v1653, %v1711
      %1713 = vmatmul.bf16.gmra.mxu0 %v528
      %v1714 = vpop.f32.mrf.mxu0
      %v1715 = vadd.f32 %v1656, %v1714
      %v1716 = vpop.f32.mrf.mxu0
      %v1717 = vadd.f32 %v1658, %v1716
      %1718 = vmatmul.bf16.gmra.mxu0 %v540
      %v1719 = vpop.f32.mrf.mxu0
      %v1720 = vadd.f32 %v1661, %v1719
      %v1721 = vpop.f32.mrf.mxu0
      %v1722 = vadd.f32 %v1663, %v1721
      %1723 = vmatmul.bf16.gmra.mxu0 %v552
      %v1724 = vpop.f32.mrf.mxu0
      %v1725 = vadd.f32 %v1666, %v1724
      %v1726 = vpop.f32.mrf.mxu0
      %v1727 = vadd.f32 %v1668, %v1726
      %1728 = vmatmul.bf16.gmra.mxu0 %v564
      %v1729 = vpop.f32.mrf.mxu0
      %v1730 = vadd.f32 %v1671, %v1729
      %v1731 = vpop.f32.mrf.mxu0
      %v1732 = vadd.f32 %v1673, %v1731
      %1733 = vmatmul.bf16.gmra.mxu0 %v576
      %v1734 = vpop.f32.mrf.mxu0
      %v1735 = vadd.f32 %v1676, %v1734
      %v1736 = vpop.f32.mrf.mxu0
      %v1737 = vadd.f32 %v1678, %v1736
      %1738 = vmatmul.bf16.gmra.mxu0 %v588
      %v1739 = vpop.f32.mrf.mxu0
      %v1740 = vadd.f32 %v1681, %v1739
      %v1741 = vpop.f32.mrf.mxu0
      %v1742 = vadd.f32 %v1683, %v1741
      %1743 = vdwg.mxu0
      %1744 = vmatpush.bf16.msra.mxu0 %v1601
      %1745 = vmatpush.bf16.msra.mxu0 %v1600
      %1746 = vmatpush.bf16.msra.mxu0 %v1599
      %1747 = vmatpush.bf16.msra.mxu0 %v1598
      %1748 = vmatpush.bf16.msra.mxu0 %v1597
      %1749 = vmatpush.bf16.msra.mxu0 %v1596
      %1750 = vmatpush.bf16.msra.mxu0 %v1595
      %1751 = vmatpush.bf16.msra.mxu0 %v1594
      %1752 = vmatmul.bf16.gmra.mxu0 %v610
      %v1753 = vpop.f32.mrf.mxu0
      %v1754 = vadd.f32 %v1695, %v1753
      %v1755 = vpop.f32.mrf.mxu0
      %v1756 = vadd.f32 %v1697, %v1755
      %1757 = vmatmul.bf16.gmra.mxu0 %v613
      %v1758 = vpop.f32.mrf.mxu0
      %v1759 = vadd.f32 %v1700, %v1758
      %v1760 = vpop.f32.mrf.mxu0
      %v1761 = vadd.f32 %v1702, %v1760
      %1762 = vmatmul.bf16.gmra.mxu0 %v616
      %v1763 = vpop.f32.mrf.mxu0
      %v1764 = vadd.f32 %v1705, %v1763
      %v1765 = vpop.f32.mrf.mxu0
      %v1766 = vadd.f32 %v1707, %v1765
      %1767 = vmatmul.bf16.gmra.mxu0 %v619
      %v1768 = vpop.f32.mrf.mxu0
      %v1769 = vadd.f32 %v1710, %v1768
      %v1770 = vpop.f32.mrf.mxu0
      %v1771 = vadd.f32 %v1712, %v1770
      %1772 = vmatmul.bf16.gmra.mxu0 %v622
      %v1773 = vpop.f32.mrf.mxu0
      %v1774 = vadd.f32 %v1715, %v1773
      %v1775 = vpop.f32.mrf.mxu0
      %v1776 = vadd.f32 %v1717, %v1775
      %1777 = vmatmul.bf16.gmra.mxu0 %v625
      %v1778 = vpop.f32.mrf.mxu0
      %v1779 = vadd.f32 %v1720, %v1778
      %v1780 = vpop.f32.mrf.mxu0
      %v1781 = vadd.f32 %v1722, %v1780
      %1782 = vmatmul.bf16.gmra.mxu0 %v628
      %v1783 = vpop.f32.mrf.mxu0
      %v1784 = vadd.f32 %v1725, %v1783
      %v1785 = vpop.f32.mrf.mxu0
      %v1786 = vadd.f32 %v1727, %v1785
      %1787 = vmatmul.bf16.gmra.mxu0 %v631
      %v1788 = vpop.f32.mrf.mxu0
      %v1789 = vadd.f32 %v1730, %v1788
      %v1790 = vpop.f32.mrf.mxu0
      %v1791 = vadd.f32 %v1732, %v1790
      %1792 = vmatmul.bf16.gmra.mxu0 %v634
      %v1793 = vpop.f32.mrf.mxu0
      %v1794 = vadd.f32 %v1735, %v1793
      %v1795 = vpop.f32.mrf.mxu0
      %v1796 = vadd.f32 %v1737, %v1795
      %1797 = vmatmul.bf16.gmra.mxu0 %v637
      %v1798 = vpop.f32.mrf.mxu0
      %v1799 = vadd.f32 %v1740, %v1798
      %v1800 = vpop.f32.mrf.mxu0
      %v1801 = vadd.f32 %v1742, %v1800
      %1802 = vdwg.mxu0
      %v1803 = vadd.f32 %v1413, %v1754
      %v1804 = vadd.f32 %v1414, %v1756
      %v1805 = vadd.f32 %v1415, %v1759
      %v1806 = vadd.f32 %v1416, %v1761
      %v1807 = vadd.f32 %v1417, %v1764
      %v1808 = vadd.f32 %v1418, %v1766
      %v1809 = vadd.f32 %v1419, %v1769
      %v1810 = vadd.f32 %v1420, %v1771
      %v1811 = vadd.f32 %v1421, %v1774
      %v1812 = vadd.f32 %v1422, %v1776
      %v1813 = vadd.f32 %v1423, %v1779
      %v1814 = vadd.f32 %v1424, %v1781
      %v1815 = vadd.f32 %v1425, %v1784
      %v1816 = vadd.f32 %v1426, %v1786
      %v1817 = vadd.f32 %v1427, %v1789
      %v1818 = vadd.f32 %v1428, %v1791
      %v1819 = vadd.f32 %v1429, %v1794
      %v1820 = vadd.f32 %v1430, %v1796
      %v1821 = vadd.f32 %v1431, %v1799
      %v1822 = vadd.f32 %v1432, %v1801
      %v1823 = vmax.f32 %v1803, 0.0
      %v1824 = vmax.f32 %v1804, 0.0
      %v1825 = vmax.f32 %v1805, 0.0
      %v1826 = vmax.f32 %v1806, 0.0
      %v1827 = vmax.f32 %v1807, 0.0
      %v1828 = vmax.f32 %v1808, 0.0
      %v1829 = vmax.f32 %v1809, 0.0
      %v1830 = vmax.f32 %v1810, 0.0
      %v1831 = vmax.f32 %v1811, 0.0
      %v1832 = vmax.f32 %v1812, 0.0
      %v1833 = vmax.f32 %v1813, 0.0
      %v1834 = vmax.f32 %v1814, 0.0
      %v1835 = vmax.f32 %v1815, 0.0
      %v1836 = vmax.f32 %v1816, 0.0
      %v1837 = vmax.f32 %v1817, 0.0
      %v1838 = vmax.f32 %v1818, 0.0
      %v1839 = vmax.f32 %v1819, 0.0
      %v1840 = vmax.f32 %v1820, 0.0
      %v1841 = vmax.f32 %v1821, 0.0
      %v1842 = vmax.f32 %v1822, 0.0
      %p1843 = scmp.eq.s32.totalorder %s21, 0
      %s1844 = scalar_select %p1843, 1, 0
      %v1845 = vstv %s1844
      %vm1846 = vcmp.eq.s32.totalorder %v1845, 1
      %v1847 = vsel %vm1846, %v1827, %v1823
      %v1848 = vsel %vm1846, %v1828, %v1824
      %p1849 = scmp.eq.s32.totalorder %s21, 1
      %s1850 = scalar_select %p1849, 1, 0
      %v1851 = vstv %s1850
      %vm1852 = vcmp.eq.s32.totalorder %v1851, 1
      %v1853 = vsel %vm1852, %v1837, %v1841
      %v1854 = vsel %vm1852, %v1838, %v1842
      %v1865 = vrot.slane %v1847, 1
      %v1866 = vrot.slane %v1825, 1
      %v1867 = vrot.slane %v1827, 1
      %v1868 = vrot.slane %v1829, 1
      %v1869 = vrot.slane %v1831, 1
      %v1870 = vrot.slane %v1833, 1
      %v1871 = vrot.slane %v1835, 1
      %v1872 = vrot.slane %v1837, 1
      %v1873 = vrot.slane %v1839, 1
      %v1874 = vrot.slane %v1853, 1
      %vm1895 = vcmask 1040384
      %v1896 = vrot.slane %v1847, 7
      %v1897 = vrot.slane %v1848, 7
      %v1898 = vsel %vm1895, %v1896, %v1897
      %v1899 = vrot.slane %v1825, 7
      %v1900 = vrot.slane %v1826, 7
      %v1901 = vsel %vm1895, %v1899, %v1900
      %v1902 = vrot.slane %v1827, 7
      %v1903 = vrot.slane %v1828, 7
      %v1904 = vsel %vm1895, %v1902, %v1903
      %v1905 = vrot.slane %v1829, 7
      %v1906 = vrot.slane %v1830, 7
      %v1907 = vsel %vm1895, %v1905, %v1906
      %v1908 = vrot.slane %v1831, 7
      %v1909 = vrot.slane %v1832, 7
      %v1910 = vsel %vm1895, %v1908, %v1909
      %v1911 = vrot.slane %v1833, 7
      %v1912 = vrot.slane %v1834, 7
      %v1913 = vsel %vm1895, %v1911, %v1912
      %v1914 = vrot.slane %v1835, 7
      %v1915 = vrot.slane %v1836, 7
      %v1916 = vsel %vm1895, %v1914, %v1915
      %v1917 = vrot.slane %v1837, 7
      %v1918 = vrot.slane %v1838, 7
      %v1919 = vsel %vm1895, %v1917, %v1918
      %v1920 = vrot.slane %v1839, 7
      %v1921 = vrot.slane %v1840, 7
      %v1922 = vsel %vm1895, %v1920, %v1921
      %v1923 = vrot.slane %v1853, 7
      %v1924 = vrot.slane %v1854, 7
      %v1925 = vsel %vm1895, %v1923, %v1924
      %v1956 = vrot.slane %v1848, 5
      %v1957 = vrot.slane %v1826, 5
      %v1958 = vrot.slane %v1828, 5
      %v1959 = vrot.slane %v1830, 5
      %v1960 = vrot.slane %v1832, 5
      %v1961 = vrot.slane %v1834, 5
      %v1962 = vrot.slane %v1836, 5
      %v1963 = vrot.slane %v1838, 5
      %v1964 = vrot.slane %v1840, 5
      %v1965 = vrot.slane %v1854, 5
      %v1976 = vsel %vm1895, %v1865, %v1896
      %v1977 = vsel %vm1895, %v1866, %v1899
      %v1978 = vsel %vm1895, %v1867, %v1902
      %v1979 = vsel %vm1895, %v1868, %v1905
      %v1980 = vsel %vm1895, %v1869, %v1908
      %v1981 = vsel %vm1895, %v1870, %v1911
      %v1982 = vsel %vm1895, %v1871, %v1914
      %v1983 = vsel %vm1895, %v1872, %v1917
      %v1984 = vsel %vm1895, %v1873, %v1920
      %v1985 = vsel %vm1895, %v1874, %v1923
      %v1986 = vsel %vm1895, %v1897, %v1956
      %v1987 = vsel %vm1895, %v1900, %v1957
      %v1988 = vsel %vm1895, %v1903, %v1958
      %v1989 = vsel %vm1895, %v1906, %v1959
      %v1990 = vsel %vm1895, %v1909, %v1960
      %v1991 = vsel %vm1895, %v1912, %v1961
      %v1992 = vsel %vm1895, %v1915, %v1962
      %v1993 = vsel %vm1895, %v1918, %v1963
      %v1994 = vsel %vm1895, %v1921, %v1964
      %v1995 = vsel %vm1895, %v1924, %v1965
      %v1996 = vpack.c.bf16 %v1976, %v1976
      %v1997 = vpack.c.bf16 %v1898, %v1898
      %v1998 = vpack.c.bf16 %v1986, %v1986
      %v1999 = vpack.c.bf16 %v1977, %v1977
      %v2000 = vpack.c.bf16 %v1901, %v1901
      %v2001 = vpack.c.bf16 %v1987, %v1987
      %v2002 = vpack.c.bf16 %v1978, %v1978
      %v2003 = vpack.c.bf16 %v1904, %v1904
      %v2004 = vpack.c.bf16 %v1988, %v1988
      %v2005 = vpack.c.bf16 %v1979, %v1979
      %v2006 = vpack.c.bf16 %v1907, %v1907
      %v2007 = vpack.c.bf16 %v1989, %v1989
      %v2008 = vpack.c.bf16 %v1980, %v1980
      %v2009 = vpack.c.bf16 %v1910, %v1910
      %v2010 = vpack.c.bf16 %v1990, %v1990
      %v2011 = vpack.c.bf16 %v1981, %v1981
      %v2012 = vpack.c.bf16 %v1913, %v1913
      %v2013 = vpack.c.bf16 %v1991, %v1991
      %v2014 = vpack.c.bf16 %v1982, %v1982
      %v2015 = vpack.c.bf16 %v1916, %v1916
      %v2016 = vpack.c.bf16 %v1992, %v1992
      %v2017 = vpack.c.bf16 %v1983, %v1983
      %v2018 = vpack.c.bf16 %v1919, %v1919
      %v2019 = vpack.c.bf16 %v1993, %v1993
      %v2020 = vpack.c.bf16 %v1984, %v1984
      %v2021 = vpack.c.bf16 %v1922, %v1922
      %v2022 = vpack.c.bf16 %v1994, %v1994
      %v2023 = vpack.c.bf16 %v1985, %v1985
      %v2024 = vpack.c.bf16 %v1925, %v1925
      %v2025 = vpack.c.bf16 %v1995, %v1995
      %v2046 = vunpack.c.l.b16 %v1996
      %v2047 = vunpack.c.l.b16 %v1997
      %v2048 = vunpack.c.l.b16 %v1999
      %v2049 = vunpack.c.l.b16 %v2000
      %v2050 = vunpack.c.l.b16 %v2002
      %v2051 = vunpack.c.l.b16 %v2003
      %v2052 = vunpack.c.l.b16 %v2005
      %v2053 = vunpack.c.l.b16 %v2006
      %v2054 = vunpack.c.l.b16 %v2008
      %v2055 = vunpack.c.l.b16 %v2009
      %v2056 = vunpack.c.l.b16 %v2011
      %v2057 = vunpack.c.l.b16 %v2012
      %v2058 = vunpack.c.l.b16 %v2014
      %v2059 = vunpack.c.l.b16 %v2015
      %v2060 = vunpack.c.l.b16 %v2017
      %v2061 = vunpack.c.l.b16 %v2018
      %v2062 = vunpack.c.l.b16 %v2020
      %v2063 = vunpack.c.l.b16 %v2021
      %v2064 = vunpack.c.l.b16 %v2023
      %v2065 = vunpack.c.l.b16 %v2024
      %v2066 = vpack.c.b16 %v2047, %v2046
      %v2067 = vpack.c.b16 %v2049, %v2048
      %v2068 = vpack.c.b16 %v2051, %v2050
      %v2069 = vpack.c.b16 %v2053, %v2052
      %v2070 = vpack.c.b16 %v2055, %v2054
      %v2071 = vpack.c.b16 %v2057, %v2056
      %v2072 = vpack.c.b16 %v2059, %v2058
      %v2073 = vpack.c.b16 %v2061, %v2060
      %v2074 = vpack.c.b16 %v2063, %v2062
      %v2075 = vpack.c.b16 %v2065, %v2064
      %v2096 = vunpack.c.l.b16 %v1998
      %v2097 = vunpack.c.l.b16 %v2001
      %v2098 = vunpack.c.l.b16 %v2004
      %v2099 = vunpack.c.l.b16 %v2007
      %v2100 = vunpack.c.l.b16 %v2010
      %v2101 = vunpack.c.l.b16 %v2013
      %v2102 = vunpack.c.l.b16 %v2016
      %v2103 = vunpack.c.l.b16 %v2019
      %v2104 = vunpack.c.l.b16 %v2022
      %v2105 = vunpack.c.l.b16 %v2025
      %v2106 = vpack.c.b16 %v2096, %v2096
      %v2107 = vpack.c.b16 %v2097, %v2097
      %v2108 = vpack.c.b16 %v2098, %v2098
      %v2109 = vpack.c.b16 %v2099, %v2099
      %v2110 = vpack.c.b16 %v2100, %v2100
      %v2111 = vpack.c.b16 %v2101, %v2101
      %v2112 = vpack.c.b16 %v2102, %v2102
      %v2113 = vpack.c.b16 %v2103, %v2103
      %v2114 = vpack.c.b16 %v2104, %v2104
      %v2115 = vpack.c.b16 %v2105, %v2105
      %v2117 = vshrl.u32 %v2066, 16
      %v2119 = vshll.u32 %v2066, 16
      %v2121 = vrot.slane %v2119, 1
      %v2122 = vor.u32 %v2117, %v2121
      %v2124 = vshll.u32 %v2106, 16
      %v2126 = vrot.slane %v2124, 1
      %v2127 = vsel %vm444, %v2122, %v2126
      %v2129 = vshrl.u32 %v2067, 16
      %v2131 = vshll.u32 %v2067, 16
      %v2133 = vrot.slane %v2131, 1
      %v2134 = vor.u32 %v2129, %v2133
      %v2136 = vshll.u32 %v2107, 16
      %v2138 = vrot.slane %v2136, 1
      %v2139 = vsel %vm444, %v2134, %v2138
      %v2141 = vshrl.u32 %v2068, 16
      %v2143 = vshll.u32 %v2068, 16
      %v2145 = vrot.slane %v2143, 1
      %v2146 = vor.u32 %v2141, %v2145
      %v2148 = vshll.u32 %v2108, 16
      %v2150 = vrot.slane %v2148, 1
      %v2151 = vsel %vm444, %v2146, %v2150
      %v2153 = vshrl.u32 %v2069, 16
      %v2155 = vshll.u32 %v2069, 16
      %v2157 = vrot.slane %v2155, 1
      %v2158 = vor.u32 %v2153, %v2157
      %v2160 = vshll.u32 %v2109, 16
      %v2162 = vrot.slane %v2160, 1
      %v2163 = vsel %vm444, %v2158, %v2162
      %v2165 = vshrl.u32 %v2070, 16
      %v2167 = vshll.u32 %v2070, 16
      %v2169 = vrot.slane %v2167, 1
      %v2170 = vor.u32 %v2165, %v2169
      %v2172 = vshll.u32 %v2110, 16
      %v2174 = vrot.slane %v2172, 1
      %v2175 = vsel %vm444, %v2170, %v2174
      %v2177 = vshrl.u32 %v2071, 16
      %v2179 = vshll.u32 %v2071, 16
      %v2181 = vrot.slane %v2179, 1
      %v2182 = vor.u32 %v2177, %v2181
      %v2184 = vshll.u32 %v2111, 16
      %v2186 = vrot.slane %v2184, 1
      %v2187 = vsel %vm444, %v2182, %v2186
      %v2189 = vshrl.u32 %v2072, 16
      %v2191 = vshll.u32 %v2072, 16
      %v2193 = vrot.slane %v2191, 1
      %v2194 = vor.u32 %v2189, %v2193
      %v2196 = vshll.u32 %v2112, 16
      %v2198 = vrot.slane %v2196, 1
      %v2199 = vsel %vm444, %v2194, %v2198
      %v2201 = vshrl.u32 %v2073, 16
      %v2203 = vshll.u32 %v2073, 16
      %v2205 = vrot.slane %v2203, 1
      %v2206 = vor.u32 %v2201, %v2205
      %v2208 = vshll.u32 %v2113, 16
      %v2210 = vrot.slane %v2208, 1
      %v2211 = vsel %vm444, %v2206, %v2210
      %v2213 = vshrl.u32 %v2074, 16
      %v2215 = vshll.u32 %v2074, 16
      %v2217 = vrot.slane %v2215, 1
      %v2218 = vor.u32 %v2213, %v2217
      %v2220 = vshll.u32 %v2114, 16
      %v2222 = vrot.slane %v2220, 1
      %v2223 = vsel %vm444, %v2218, %v2222
      %v2225 = vshrl.u32 %v2075, 16
      %v2227 = vshll.u32 %v2075, 16
      %v2229 = vrot.slane %v2227, 1
      %v2230 = vor.u32 %v2225, %v2229
      %v2232 = vshll.u32 %v2115, 16
      %v2234 = vrot.slane %v2232, 1
      %v2235 = vsel %vm444, %v2230, %v2234
      %v2246 = vrot.slane %v2066, 1
      %v2247 = vrot.slane %v2106, 1
      %v2248 = vsel %vm601, %v2246, %v2247
      %v2249 = vrot.slane %v2067, 1
      %v2250 = vrot.slane %v2107, 1
      %v2251 = vsel %vm601, %v2249, %v2250
      %v2252 = vrot.slane %v2068, 1
      %v2253 = vrot.slane %v2108, 1
      %v2254 = vsel %vm601, %v2252, %v2253
      %v2255 = vrot.slane %v2069, 1
      %v2256 = vrot.slane %v2109, 1
      %v2257 = vsel %vm601, %v2255, %v2256
      %v2258 = vrot.slane %v2070, 1
      %v2259 = vrot.slane %v2110, 1
      %v2260 = vsel %vm601, %v2258, %v2259
      %v2261 = vrot.slane %v2071, 1
      %v2262 = vrot.slane %v2111, 1
      %v2263 = vsel %vm601, %v2261, %v2262
      %v2264 = vrot.slane %v2072, 1
      %v2265 = vrot.slane %v2112, 1
      %v2266 = vsel %vm601, %v2264, %v2265
      %v2267 = vrot.slane %v2073, 1
      %v2268 = vrot.slane %v2113, 1
      %v2269 = vsel %vm601, %v2267, %v2268
      %v2270 = vrot.slane %v2074, 1
      %v2271 = vrot.slane %v2114, 1
      %v2272 = vsel %vm601, %v2270, %v2271
      %v2273 = vrot.slane %v2075, 1
      %v2274 = vrot.slane %v2115, 1
      %v2275 = vsel %vm601, %v2273, %v2274
      %v2286 = vld [vmem:[%s4] sm:$0x1]
      %v2288 = vperm.slane %v2286, 0
      %v2290 = vld [vmem:[%s3] sm:$0xf]
      %v2291 = vld [vmem:[%s3 + $0x4] sm:$0xf]
      %v2292 = vld [vmem:[%s3 + $0x8] sm:$0xf]
      %v2293 = vld [vmem:[%s3 + $0xc] sm:$0xf]
      %v2294 = vld [vmem:[%s3 + $0x10] sm:$0xf]
      %v2295 = vld [vmem:[%s3 + $0x14] sm:$0xf]
      %v2296 = vld [vmem:[%s3 + $0x18] sm:$0xf]
      %v2297 = vld [vmem:[%s3 + $0x1c] sm:$0xf]
      %v2298 = vld [vmem:[%s3 + $0x20] sm:$0xf]
      %v2299 = vld [vmem:[%s3 + $0x24] sm:$0xf]
      %v2300 = vld [vmem:[%s3 + $0x28] sm:$0xf]
      %v2301 = vld [vmem:[%s3 + $0x2c] sm:$0xf]
      %v2302 = vld [vmem:[%s3 + $0x30] sm:$0xf]
      %v2303 = vld [vmem:[%s3 + $0x34] sm:$0xf]
      %v2304 = vld [vmem:[%s3 + $0x38] sm:$0xf]
      %v2305 = vld [vmem:[%s3 + $0x3c] sm:$0xf]
      %v2306 = vld [vmem:[%s3 + $0x40] sm:$0xf]
      %v2307 = vld [vmem:[%s3 + $0x44] sm:$0xf]
      %v2308 = vld [vmem:[%s3 + $0x48] sm:$0xf]
      %v2309 = vld [vmem:[%s3 + $0x4c] sm:$0xf]
      %v2310 = vld [vmem:[%s3 + $0x50] sm:$0xf]
      %v2311 = vld [vmem:[%s3 + $0x54] sm:$0xf]
      %v2312 = vld [vmem:[%s3 + $0x58] sm:$0xf]
      %v2313 = vld [vmem:[%s3 + $0x5c] sm:$0xf]
      %v2314 = vld [vmem:[%s3 + $0x60] sm:$0xf]
      %v2315 = vld [vmem:[%s3 + $0x64] sm:$0xf]
      %v2316 = vld [vmem:[%s3 + $0x68] sm:$0xf]
      %v2317 = vld [vmem:[%s3 + $0x6c] sm:$0xf]
      %v2318 = vld [vmem:[%s3 + $0x70] sm:$0xf]
      %v2319 = vld [vmem:[%s3 + $0x74] sm:$0xf]
      %v2320 = vld [vmem:[%s3 + $0x78] sm:$0xf]
      %v2321 = vld [vmem:[%s3 + $0x7c] sm:$0xf]
      %v2322 = vld [vmem:[%s3 + $0x80] sm:$0xf]
      %v2323 = vld [vmem:[%s3 + $0x84] sm:$0xf]
      %v2324 = vld [vmem:[%s3 + $0x88] sm:$0xf]
      %v2325 = vld [vmem:[%s3 + $0x8c] sm:$0xf]
      %v2326 = vld [vmem:[%s3 + $0x90] sm:$0xf]
      %v2327 = vld [vmem:[%s3 + $0x94] sm:$0xf]
      %v2328 = vld [vmem:[%s3 + $0x98] sm:$0xf]
      %v2329 = vld [vmem:[%s3 + $0x9c] sm:$0xf]
      %v2330 = vld [vmem:[%s3 + $0xa0] sm:$0xf]
      %v2331 = vld [vmem:[%s3 + $0xa4] sm:$0xf]
      %v2332 = vld [vmem:[%s3 + $0xa8] sm:$0xf]
      %v2333 = vld [vmem:[%s3 + $0xac] sm:$0xf]
      %v2334 = vld [vmem:[%s3 + $0xb0] sm:$0xf]
      %v2335 = vld [vmem:[%s3 + $0xb4] sm:$0xf]
      %v2336 = vld [vmem:[%s3 + $0xb8] sm:$0xf]
      %v2337 = vld [vmem:[%s3 + $0xbc] sm:$0xf]
      %v2386 = vunpack.c.l.b16 %v2290
      %v2387 = vunpack.c.l.b16 %v2291
      %v2388 = vunpack.c.l.b16 %v2292
      %v2389 = vunpack.c.l.b16 %v2293
      %v2390 = vunpack.c.l.b16 %v2294
      %v2391 = vunpack.c.l.b16 %v2295
      %v2392 = vunpack.c.l.b16 %v2296
      %v2393 = vunpack.c.l.b16 %v2297
      %v2394 = vunpack.c.l.b16 %v2298
      %v2395 = vunpack.c.l.b16 %v2299
      %v2396 = vunpack.c.l.b16 %v2300
      %v2397 = vunpack.c.l.b16 %v2301
      %v2398 = vunpack.c.l.b16 %v2302
      %v2399 = vunpack.c.l.b16 %v2303
      %v2400 = vunpack.c.l.b16 %v2304
      %v2401 = vunpack.c.l.b16 %v2305
      %v2402 = vunpack.c.l.b16 %v2306
      %v2403 = vunpack.c.l.b16 %v2307
      %v2404 = vunpack.c.l.b16 %v2308
      %v2405 = vunpack.c.l.b16 %v2309
      %v2406 = vunpack.c.l.b16 %v2310
      %v2407 = vunpack.c.l.b16 %v2311
      %v2408 = vunpack.c.l.b16 %v2312
      %v2409 = vunpack.c.l.b16 %v2313
      %v2410 = vunpack.c.l.b16 %v2314
      %v2411 = vunpack.c.l.b16 %v2315
      %v2412 = vunpack.c.l.b16 %v2316
      %v2413 = vunpack.c.l.b16 %v2317
      %v2414 = vunpack.c.l.b16 %v2318
      %v2415 = vunpack.c.l.b16 %v2319
      %v2416 = vunpack.c.l.b16 %v2320
      %v2417 = vunpack.c.l.b16 %v2321
      %v2418 = vunpack.c.l.b16 %v2322
      %v2419 = vunpack.c.l.b16 %v2323
      %v2420 = vunpack.c.l.b16 %v2324
      %v2421 = vunpack.c.l.b16 %v2325
      %v2422 = vunpack.c.l.b16 %v2326
      %v2423 = vunpack.c.l.b16 %v2327
      %v2424 = vunpack.c.l.b16 %v2328
      %v2425 = vunpack.c.l.b16 %v2329
      %v2426 = vunpack.c.l.b16 %v2330
      %v2427 = vunpack.c.l.b16 %v2331
      %v2428 = vunpack.c.l.b16 %v2332
      %v2429 = vunpack.c.l.b16 %v2333
      %v2430 = vunpack.c.l.b16 %v2334
      %v2431 = vunpack.c.l.b16 %v2335
      %v2432 = vunpack.c.l.b16 %v2336
      %v2433 = vunpack.c.l.b16 %v2337
      %v2434 = vpack.c.b16 %v2387, %v2386
      %v2435 = vpack.c.b16 %v2389, %v2388
      %v2436 = vpack.c.b16 %v2391, %v2390
      %v2437 = vpack.c.b16 %v2393, %v2392
      %v2438 = vpack.c.b16 %v2395, %v2394
      %v2439 = vpack.c.b16 %v2397, %v2396
      %v2440 = vpack.c.b16 %v2399, %v2398
      %v2441 = vpack.c.b16 %v2401, %v2400
      %v2442 = vpack.c.b16 %v2403, %v2402
      %v2443 = vpack.c.b16 %v2405, %v2404
      %v2444 = vpack.c.b16 %v2407, %v2406
      %v2445 = vpack.c.b16 %v2409, %v2408
      %v2446 = vpack.c.b16 %v2411, %v2410
      %v2447 = vpack.c.b16 %v2413, %v2412
      %v2448 = vpack.c.b16 %v2415, %v2414
      %v2449 = vpack.c.b16 %v2417, %v2416
      %v2450 = vpack.c.b16 %v2419, %v2418
      %v2451 = vpack.c.b16 %v2421, %v2420
      %v2452 = vpack.c.b16 %v2423, %v2422
      %v2453 = vpack.c.b16 %v2425, %v2424
      %v2454 = vpack.c.b16 %v2427, %v2426
      %v2455 = vpack.c.b16 %v2429, %v2428
      %v2456 = vpack.c.b16 %v2431, %v2430
      %v2457 = vpack.c.b16 %v2433, %v2432
      %2482 = vmatpush.bf16.msra.mxu0 %v2441
      %2483 = vmatpush.bf16.msra.mxu0 %v2440
      %2484 = vmatpush.bf16.msra.mxu0 %v2439
      %2485 = vmatpush.bf16.msra.mxu0 %v2438
      %2486 = vmatpush.bf16.msra.mxu0 %v2437
      %2487 = vmatpush.bf16.msra.mxu0 %v2436
      %2488 = vmatpush.bf16.msra.mxu0 %v2435
      %2489 = vmatpush.bf16.msra.mxu0 %v2434
      %2490 = vmatmul.bf16.gmra.mxu0 %v2066
      %v2491 = vpop.f32.mrf.mxu0
      %v2492 = vadd.f32 0.0, %v2491
      %v2493 = vpop.f32.mrf.mxu0
      %v2494 = vadd.f32 0.0, %v2493
      %2495 = vmatmul.bf16.gmra.mxu0 %v2067
      %v2496 = vpop.f32.mrf.mxu0
      %v2497 = vadd.f32 0.0, %v2496
      %v2498 = vpop.f32.mrf.mxu0
      %v2499 = vadd.f32 0.0, %v2498
      %2500 = vmatmul.bf16.gmra.mxu0 %v2068
      %v2501 = vpop.f32.mrf.mxu0
      %v2502 = vadd.f32 0.0, %v2501
      %v2503 = vpop.f32.mrf.mxu0
      %v2504 = vadd.f32 0.0, %v2503
      %2505 = vmatmul.bf16.gmra.mxu0 %v2069
      %v2506 = vpop.f32.mrf.mxu0
      %v2507 = vadd.f32 0.0, %v2506
      %v2508 = vpop.f32.mrf.mxu0
      %v2509 = vadd.f32 0.0, %v2508
      %2510 = vmatmul.bf16.gmra.mxu0 %v2070
      %v2511 = vpop.f32.mrf.mxu0
      %v2512 = vadd.f32 0.0, %v2511
      %v2513 = vpop.f32.mrf.mxu0
      %v2514 = vadd.f32 0.0, %v2513
      %2515 = vmatmul.bf16.gmra.mxu0 %v2071
      %v2516 = vpop.f32.mrf.mxu0
      %v2517 = vadd.f32 0.0, %v2516
      %v2518 = vpop.f32.mrf.mxu0
      %v2519 = vadd.f32 0.0, %v2518
      %2520 = vmatmul.bf16.gmra.mxu0 %v2072
      %v2521 = vpop.f32.mrf.mxu0
      %v2522 = vadd.f32 0.0, %v2521
      %v2523 = vpop.f32.mrf.mxu0
      %v2524 = vadd.f32 0.0, %v2523
      %2525 = vmatmul.bf16.gmra.mxu0 %v2073
      %v2526 = vpop.f32.mrf.mxu0
      %v2527 = vadd.f32 0.0, %v2526
      %v2528 = vpop.f32.mrf.mxu0
      %v2529 = vadd.f32 0.0, %v2528
      %2530 = vdwg.mxu0
      %2531 = vmatpush.bf16.msra.mxu0 %v2449
      %2532 = vmatpush.bf16.msra.mxu0 %v2448
      %2533 = vmatpush.bf16.msra.mxu0 %v2447
      %2534 = vmatpush.bf16.msra.mxu0 %v2446
      %2535 = vmatpush.bf16.msra.mxu0 %v2445
      %2536 = vmatpush.bf16.msra.mxu0 %v2444
      %2537 = vmatpush.bf16.msra.mxu0 %v2443
      %2538 = vmatpush.bf16.msra.mxu0 %v2442
      %2539 = vmatmul.bf16.gmra.mxu0 %v2127
      %v2540 = vpop.f32.mrf.mxu0
      %v2541 = vadd.f32 %v2492, %v2540
      %v2542 = vpop.f32.mrf.mxu0
      %v2543 = vadd.f32 %v2494, %v2542
      %2544 = vmatmul.bf16.gmra.mxu0 %v2139
      %v2545 = vpop.f32.mrf.mxu0
      %v2546 = vadd.f32 %v2497, %v2545
      %v2547 = vpop.f32.mrf.mxu0
      %v2548 = vadd.f32 %v2499, %v2547
      %2549 = vmatmul.bf16.gmra.mxu0 %v2151
      %v2550 = vpop.f32.mrf.mxu0
      %v2551 = vadd.f32 %v2502, %v2550
      %v2552 = vpop.f32.mrf.mxu0
      %v2553 = vadd.f32 %v2504, %v2552
      %2554 = vmatmul.bf16.gmra.mxu0 %v2163
      %v2555 = vpop.f32.mrf.mxu0
      %v2556 = vadd.f32 %v2507, %v2555
      %v2557 = vpop.f32.mrf.mxu0
      %v2558 = vadd.f32 %v2509, %v2557
      %2559 = vmatmul.bf16.gmra.mxu0 %v2175
      %v2560 = vpop.f32.mrf.mxu0
      %v2561 = vadd.f32 %v2512, %v2560
      %v2562 = vpop.f32.mrf.mxu0
      %v2563 = vadd.f32 %v2514, %v2562
      %2564 = vmatmul.bf16.gmra.mxu0 %v2187
      %v2565 = vpop.f32.mrf.mxu0
      %v2566 = vadd.f32 %v2517, %v2565
      %v2567 = vpop.f32.mrf.mxu0
      %v2568 = vadd.f32 %v2519, %v2567
      %2569 = vmatmul.bf16.gmra.mxu0 %v2199
      %v2570 = vpop.f32.mrf.mxu0
      %v2571 = vadd.f32 %v2522, %v2570
      %v2572 = vpop.f32.mrf.mxu0
      %v2573 = vadd.f32 %v2524, %v2572
      %2574 = vmatmul.bf16.gmra.mxu0 %v2211
      %v2575 = vpop.f32.mrf.mxu0
      %v2576 = vadd.f32 %v2527, %v2575
      %v2577 = vpop.f32.mrf.mxu0
      %v2578 = vadd.f32 %v2529, %v2577
      %2579 = vdwg.mxu0
      %2580 = vmatpush.bf16.msra.mxu0 %v2457
      %2581 = vmatpush.bf16.msra.mxu0 %v2456
      %2582 = vmatpush.bf16.msra.mxu0 %v2455
      %2583 = vmatpush.bf16.msra.mxu0 %v2454
      %2584 = vmatpush.bf16.msra.mxu0 %v2453
      %2585 = vmatpush.bf16.msra.mxu0 %v2452
      %2586 = vmatpush.bf16.msra.mxu0 %v2451
      %2587 = vmatpush.bf16.msra.mxu0 %v2450
      %2588 = vmatmul.bf16.gmra.mxu0 %v2248
      %v2589 = vpop.f32.mrf.mxu0
      %v2590 = vadd.f32 %v2541, %v2589
      %v2591 = vpop.f32.mrf.mxu0
      %v2592 = vadd.f32 %v2543, %v2591
      %2593 = vmatmul.bf16.gmra.mxu0 %v2251
      %v2594 = vpop.f32.mrf.mxu0
      %v2595 = vadd.f32 %v2546, %v2594
      %v2596 = vpop.f32.mrf.mxu0
      %v2597 = vadd.f32 %v2548, %v2596
      %2598 = vmatmul.bf16.gmra.mxu0 %v2254
      %v2599 = vpop.f32.mrf.mxu0
      %v2600 = vadd.f32 %v2551, %v2599
      %v2601 = vpop.f32.mrf.mxu0
      %v2602 = vadd.f32 %v2553, %v2601
      %2603 = vmatmul.bf16.gmra.mxu0 %v2257
      %v2604 = vpop.f32.mrf.mxu0
      %v2605 = vadd.f32 %v2556, %v2604
      %v2606 = vpop.f32.mrf.mxu0
      %v2607 = vadd.f32 %v2558, %v2606
      %2608 = vmatmul.bf16.gmra.mxu0 %v2260
      %v2609 = vpop.f32.mrf.mxu0
      %v2610 = vadd.f32 %v2561, %v2609
      %v2611 = vpop.f32.mrf.mxu0
      %v2612 = vadd.f32 %v2563, %v2611
      %2613 = vmatmul.bf16.gmra.mxu0 %v2263
      %v2614 = vpop.f32.mrf.mxu0
      %v2615 = vadd.f32 %v2566, %v2614
      %v2616 = vpop.f32.mrf.mxu0
      %v2617 = vadd.f32 %v2568, %v2616
      %2618 = vmatmul.bf16.gmra.mxu0 %v2266
      %v2619 = vpop.f32.mrf.mxu0
      %v2620 = vadd.f32 %v2571, %v2619
      %v2621 = vpop.f32.mrf.mxu0
      %v2622 = vadd.f32 %v2573, %v2621
      %2623 = vmatmul.bf16.gmra.mxu0 %v2269
      %v2624 = vpop.f32.mrf.mxu0
      %v2625 = vadd.f32 %v2576, %v2624
      %v2626 = vpop.f32.mrf.mxu0
      %v2627 = vadd.f32 %v2578, %v2626
      %2628 = vdwg.mxu0
      %v2629 = vadd.f32 %v2288, %v2590
      %v2630 = vadd.f32 %v2288, %v2592
      %v2631 = vadd.f32 %v2288, %v2595
      %v2632 = vadd.f32 %v2288, %v2597
      %v2633 = vadd.f32 %v2288, %v2600
      %v2634 = vadd.f32 %v2288, %v2602
      %v2635 = vadd.f32 %v2288, %v2605
      %v2636 = vadd.f32 %v2288, %v2607
      %v2637 = vadd.f32 %v2288, %v2610
      %v2638 = vadd.f32 %v2288, %v2612
      %v2639 = vadd.f32 %v2288, %v2615
      %v2640 = vadd.f32 %v2288, %v2617
      %v2641 = vadd.f32 %v2288, %v2620
      %v2642 = vadd.f32 %v2288, %v2622
      %v2643 = vadd.f32 %v2288, %v2625
      %v2644 = vadd.f32 %v2288, %v2627
      %s2645 = scalar_lea.vmem %s3, 192
      %v2646 = vld [vmem:[%s2645] sm:$0xf]
      %v2647 = vld [vmem:[%s2645 + $0x4] sm:$0xf]
      %v2648 = vld [vmem:[%s2645 + $0x8] sm:$0xf]
      %v2649 = vld [vmem:[%s2645 + $0xc] sm:$0xf]
      %v2650 = vld [vmem:[%s2645 + $0x10] sm:$0xf]
      %v2651 = vld [vmem:[%s2645 + $0x14] sm:$0xf]
      %v2652 = vld [vmem:[%s2645 + $0x18] sm:$0xf]
      %v2653 = vld [vmem:[%s2645 + $0x1c] sm:$0xf]
      %v2654 = vld [vmem:[%s2645 + $0x20] sm:$0xf]
      %v2655 = vld [vmem:[%s2645 + $0x24] sm:$0xf]
      %v2656 = vld [vmem:[%s2645 + $0x28] sm:$0xf]
      %v2657 = vld [vmem:[%s2645 + $0x2c] sm:$0xf]
      %v2658 = vld [vmem:[%s2645 + $0x30] sm:$0xf]
      %v2659 = vld [vmem:[%s2645 + $0x34] sm:$0xf]
      %v2660 = vld [vmem:[%s2645 + $0x38] sm:$0xf]
      %v2661 = vld [vmem:[%s2645 + $0x3c] sm:$0xf]
      %v2662 = vld [vmem:[%s2645 + $0x40] sm:$0xf]
      %v2663 = vld [vmem:[%s2645 + $0x44] sm:$0xf]
      %v2664 = vld [vmem:[%s2645 + $0x48] sm:$0xf]
      %v2665 = vld [vmem:[%s2645 + $0x4c] sm:$0xf]
      %v2666 = vld [vmem:[%s2645 + $0x50] sm:$0xf]
      %v2667 = vld [vmem:[%s2645 + $0x54] sm:$0xf]
      %v2668 = vld [vmem:[%s2645 + $0x58] sm:$0xf]
      %v2669 = vld [vmem:[%s2645 + $0x5c] sm:$0xf]
      %v2670 = vld [vmem:[%s2645 + $0x60] sm:$0xf]
      %v2671 = vld [vmem:[%s2645 + $0x64] sm:$0xf]
      %v2672 = vld [vmem:[%s2645 + $0x68] sm:$0xf]
      %v2673 = vld [vmem:[%s2645 + $0x6c] sm:$0xf]
      %v2674 = vld [vmem:[%s2645 + $0x70] sm:$0xf]
      %v2675 = vld [vmem:[%s2645 + $0x74] sm:$0xf]
      %v2676 = vld [vmem:[%s2645 + $0x78] sm:$0xf]
      %v2677 = vld [vmem:[%s2645 + $0x7c] sm:$0xf]
      %v2678 = vld [vmem:[%s2645 + $0x80] sm:$0xf]
      %v2679 = vld [vmem:[%s2645 + $0x84] sm:$0xf]
      %v2680 = vld [vmem:[%s2645 + $0x88] sm:$0xf]
      %v2681 = vld [vmem:[%s2645 + $0x8c] sm:$0xf]
      %v2682 = vld [vmem:[%s2645 + $0x90] sm:$0xf]
      %v2683 = vld [vmem:[%s2645 + $0x94] sm:$0xf]
      %v2684 = vld [vmem:[%s2645 + $0x98] sm:$0xf]
      %v2685 = vld [vmem:[%s2645 + $0x9c] sm:$0xf]
      %v2686 = vld [vmem:[%s2645 + $0xa0] sm:$0xf]
      %v2687 = vld [vmem:[%s2645 + $0xa4] sm:$0xf]
      %v2688 = vld [vmem:[%s2645 + $0xa8] sm:$0xf]
      %v2689 = vld [vmem:[%s2645 + $0xac] sm:$0xf]
      %v2690 = vld [vmem:[%s2645 + $0xb0] sm:$0xf]
      %v2691 = vld [vmem:[%s2645 + $0xb4] sm:$0xf]
      %v2692 = vld [vmem:[%s2645 + $0xb8] sm:$0xf]
      %v2693 = vld [vmem:[%s2645 + $0xbc] sm:$0xf]
      %v2742 = vunpack.c.l.b16 %v2646
      %v2743 = vunpack.c.l.b16 %v2647
      %v2744 = vunpack.c.l.b16 %v2648
      %v2745 = vunpack.c.l.b16 %v2649
      %v2746 = vunpack.c.l.b16 %v2650
      %v2747 = vunpack.c.l.b16 %v2651
      %v2748 = vunpack.c.l.b16 %v2652
      %v2749 = vunpack.c.l.b16 %v2653
      %v2750 = vunpack.c.l.b16 %v2654
      %v2751 = vunpack.c.l.b16 %v2655
      %v2752 = vunpack.c.l.b16 %v2656
      %v2753 = vunpack.c.l.b16 %v2657
      %v2754 = vunpack.c.l.b16 %v2658
      %v2755 = vunpack.c.l.b16 %v2659
      %v2756 = vunpack.c.l.b16 %v2660
      %v2757 = vunpack.c.l.b16 %v2661
      %v2758 = vunpack.c.l.b16 %v2662
      %v2759 = vunpack.c.l.b16 %v2663
      %v2760 = vunpack.c.l.b16 %v2664
      %v2761 = vunpack.c.l.b16 %v2665
      %v2762 = vunpack.c.l.b16 %v2666
      %v2763 = vunpack.c.l.b16 %v2667
      %v2764 = vunpack.c.l.b16 %v2668
      %v2765 = vunpack.c.l.b16 %v2669
      %v2766 = vunpack.c.l.b16 %v2670
      %v2767 = vunpack.c.l.b16 %v2671
      %v2768 = vunpack.c.l.b16 %v2672
      %v2769 = vunpack.c.l.b16 %v2673
      %v2770 = vunpack.c.l.b16 %v2674
      %v2771 = vunpack.c.l.b16 %v2675
      %v2772 = vunpack.c.l.b16 %v2676
      %v2773 = vunpack.c.l.b16 %v2677
      %v2774 = vunpack.c.l.b16 %v2678
      %v2775 = vunpack.c.l.b16 %v2679
      %v2776 = vunpack.c.l.b16 %v2680
      %v2777 = vunpack.c.l.b16 %v2681
      %v2778 = vunpack.c.l.b16 %v2682
      %v2779 = vunpack.c.l.b16 %v2683
      %v2780 = vunpack.c.l.b16 %v2684
      %v2781 = vunpack.c.l.b16 %v2685
      %v2782 = vunpack.c.l.b16 %v2686
      %v2783 = vunpack.c.l.b16 %v2687
      %v2784 = vunpack.c.l.b16 %v2688
      %v2785 = vunpack.c.l.b16 %v2689
      %v2786 = vunpack.c.l.b16 %v2690
      %v2787 = vunpack.c.l.b16 %v2691
      %v2788 = vunpack.c.l.b16 %v2692
      %v2789 = vunpack.c.l.b16 %v2693
      %v2790 = vpack.c.b16 %v2743, %v2742
      %v2791 = vpack.c.b16 %v2745, %v2744
      %v2792 = vpack.c.b16 %v2747, %v2746
      %v2793 = vpack.c.b16 %v2749, %v2748
      %v2794 = vpack.c.b16 %v2751, %v2750
      %v2795 = vpack.c.b16 %v2753, %v2752
      %v2796 = vpack.c.b16 %v2755, %v2754
      %v2797 = vpack.c.b16 %v2757, %v2756
      %v2798 = vpack.c.b16 %v2759, %v2758
      %v2799 = vpack.c.b16 %v2761, %v2760
      %v2800 = vpack.c.b16 %v2763, %v2762
      %v2801 = vpack.c.b16 %v2765, %v2764
      %v2802 = vpack.c.b16 %v2767, %v2766
      %v2803 = vpack.c.b16 %v2769, %v2768
      %v2804 = vpack.c.b16 %v2771, %v2770
      %v2805 = vpack.c.b16 %v2773, %v2772
      %v2806 = vpack.c.b16 %v2775, %v2774
      %v2807 = vpack.c.b16 %v2777, %v2776
      %v2808 = vpack.c.b16 %v2779, %v2778
      %v2809 = vpack.c.b16 %v2781, %v2780
      %v2810 = vpack.c.b16 %v2783, %v2782
      %v2811 = vpack.c.b16 %v2785, %v2784
      %v2812 = vpack.c.b16 %v2787, %v2786
      %v2813 = vpack.c.b16 %v2789, %v2788
      %2838 = vmatpush.bf16.msra.mxu0 %v2797
      %2839 = vmatpush.bf16.msra.mxu0 %v2796
      %2840 = vmatpush.bf16.msra.mxu0 %v2795
      %2841 = vmatpush.bf16.msra.mxu0 %v2794
      %2842 = vmatpush.bf16.msra.mxu0 %v2793
      %2843 = vmatpush.bf16.msra.mxu0 %v2792
      %2844 = vmatpush.bf16.msra.mxu0 %v2791
      %2845 = vmatpush.bf16.msra.mxu0 %v2790
      %2846 = vmatmul.bf16.gmra.mxu0 %v2067
      %v2847 = vpop.f32.mrf.mxu0
      %v2848 = vadd.f32 0.0, %v2847
      %v2849 = vpop.f32.mrf.mxu0
      %v2850 = vadd.f32 0.0, %v2849
      %2851 = vmatmul.bf16.gmra.mxu0 %v2068
      %v2852 = vpop.f32.mrf.mxu0
      %v2853 = vadd.f32 0.0, %v2852
      %v2854 = vpop.f32.mrf.mxu0
      %v2855 = vadd.f32 0.0, %v2854
      %2856 = vmatmul.bf16.gmra.mxu0 %v2069
      %v2857 = vpop.f32.mrf.mxu0
      %v2858 = vadd.f32 0.0, %v2857
      %v2859 = vpop.f32.mrf.mxu0
      %v2860 = vadd.f32 0.0, %v2859
      %2861 = vmatmul.bf16.gmra.mxu0 %v2070
      %v2862 = vpop.f32.mrf.mxu0
      %v2863 = vadd.f32 0.0, %v2862
      %v2864 = vpop.f32.mrf.mxu0
      %v2865 = vadd.f32 0.0, %v2864
      %2866 = vmatmul.bf16.gmra.mxu0 %v2071
      %v2867 = vpop.f32.mrf.mxu0
      %v2868 = vadd.f32 0.0, %v2867
      %v2869 = vpop.f32.mrf.mxu0
      %v2870 = vadd.f32 0.0, %v2869
      %2871 = vmatmul.bf16.gmra.mxu0 %v2072
      %v2872 = vpop.f32.mrf.mxu0
      %v2873 = vadd.f32 0.0, %v2872
      %v2874 = vpop.f32.mrf.mxu0
      %v2875 = vadd.f32 0.0, %v2874
      %2876 = vmatmul.bf16.gmra.mxu0 %v2073
      %v2877 = vpop.f32.mrf.mxu0
      %v2878 = vadd.f32 0.0, %v2877
      %v2879 = vpop.f32.mrf.mxu0
      %v2880 = vadd.f32 0.0, %v2879
      %2881 = vmatmul.bf16.gmra.mxu0 %v2074
      %v2882 = vpop.f32.mrf.mxu0
      %v2883 = vadd.f32 0.0, %v2882
      %v2884 = vpop.f32.mrf.mxu0
      %v2885 = vadd.f32 0.0, %v2884
      %2886 = vdwg.mxu0
      %2887 = vmatpush.bf16.msra.mxu0 %v2805
      %2888 = vmatpush.bf16.msra.mxu0 %v2804
      %2889 = vmatpush.bf16.msra.mxu0 %v2803
      %2890 = vmatpush.bf16.msra.mxu0 %v2802
      %2891 = vmatpush.bf16.msra.mxu0 %v2801
      %2892 = vmatpush.bf16.msra.mxu0 %v2800
      %2893 = vmatpush.bf16.msra.mxu0 %v2799
      %2894 = vmatpush.bf16.msra.mxu0 %v2798
      %2895 = vmatmul.bf16.gmra.mxu0 %v2139
      %v2896 = vpop.f32.mrf.mxu0
      %v2897 = vadd.f32 %v2848, %v2896
      %v2898 = vpop.f32.mrf.mxu0
      %v2899 = vadd.f32 %v2850, %v2898
      %2900 = vmatmul.bf16.gmra.mxu0 %v2151
      %v2901 = vpop.f32.mrf.mxu0
      %v2902 = vadd.f32 %v2853, %v2901
      %v2903 = vpop.f32.mrf.mxu0
      %v2904 = vadd.f32 %v2855, %v2903
      %2905 = vmatmul.bf16.gmra.mxu0 %v2163
      %v2906 = vpop.f32.mrf.mxu0
      %v2907 = vadd.f32 %v2858, %v2906
      %v2908 = vpop.f32.mrf.mxu0
      %v2909 = vadd.f32 %v2860, %v2908
      %2910 = vmatmul.bf16.gmra.mxu0 %v2175
      %v2911 = vpop.f32.mrf.mxu0
      %v2912 = vadd.f32 %v2863, %v2911
      %v2913 = vpop.f32.mrf.mxu0
      %v2914 = vadd.f32 %v2865, %v2913
      %2915 = vmatmul.bf16.gmra.mxu0 %v2187
      %v2916 = vpop.f32.mrf.mxu0
      %v2917 = vadd.f32 %v2868, %v2916
      %v2918 = vpop.f32.mrf.mxu0
      %v2919 = vadd.f32 %v2870, %v2918
      %2920 = vmatmul.bf16.gmra.mxu0 %v2199
      %v2921 = vpop.f32.mrf.mxu0
      %v2922 = vadd.f32 %v2873, %v2921
      %v2923 = vpop.f32.mrf.mxu0
      %v2924 = vadd.f32 %v2875, %v2923
      %2925 = vmatmul.bf16.gmra.mxu0 %v2211
      %v2926 = vpop.f32.mrf.mxu0
      %v2927 = vadd.f32 %v2878, %v2926
      %v2928 = vpop.f32.mrf.mxu0
      %v2929 = vadd.f32 %v2880, %v2928
      %2930 = vmatmul.bf16.gmra.mxu0 %v2223
      %v2931 = vpop.f32.mrf.mxu0
      %v2932 = vadd.f32 %v2883, %v2931
      %v2933 = vpop.f32.mrf.mxu0
      %v2934 = vadd.f32 %v2885, %v2933
      %2935 = vdwg.mxu0
      %2936 = vmatpush.bf16.msra.mxu0 %v2813
      %2937 = vmatpush.bf16.msra.mxu0 %v2812
      %2938 = vmatpush.bf16.msra.mxu0 %v2811
      %2939 = vmatpush.bf16.msra.mxu0 %v2810
      %2940 = vmatpush.bf16.msra.mxu0 %v2809
      %2941 = vmatpush.bf16.msra.mxu0 %v2808
      %2942 = vmatpush.bf16.msra.mxu0 %v2807
      %2943 = vmatpush.bf16.msra.mxu0 %v2806
      %2944 = vmatmul.bf16.gmra.mxu0 %v2251
      %v2945 = vpop.f32.mrf.mxu0
      %v2946 = vadd.f32 %v2897, %v2945
      %v2947 = vpop.f32.mrf.mxu0
      %v2948 = vadd.f32 %v2899, %v2947
      %2949 = vmatmul.bf16.gmra.mxu0 %v2254
      %v2950 = vpop.f32.mrf.mxu0
      %v2951 = vadd.f32 %v2902, %v2950
      %v2952 = vpop.f32.mrf.mxu0
      %v2953 = vadd.f32 %v2904, %v2952
      %2954 = vmatmul.bf16.gmra.mxu0 %v2257
      %v2955 = vpop.f32.mrf.mxu0
      %v2956 = vadd.f32 %v2907, %v2955
      %v2957 = vpop.f32.mrf.mxu0
      %v2958 = vadd.f32 %v2909, %v2957
      %2959 = vmatmul.bf16.gmra.mxu0 %v2260
      %v2960 = vpop.f32.mrf.mxu0
      %v2961 = vadd.f32 %v2912, %v2960
      %v2962 = vpop.f32.mrf.mxu0
      %v2963 = vadd.f32 %v2914, %v2962
      %2964 = vmatmul.bf16.gmra.mxu0 %v2263
      %v2965 = vpop.f32.mrf.mxu0
      %v2966 = vadd.f32 %v2917, %v2965
      %v2967 = vpop.f32.mrf.mxu0
      %v2968 = vadd.f32 %v2919, %v2967
      %2969 = vmatmul.bf16.gmra.mxu0 %v2266
      %v2970 = vpop.f32.mrf.mxu0
      %v2971 = vadd.f32 %v2922, %v2970
      %v2972 = vpop.f32.mrf.mxu0
      %v2973 = vadd.f32 %v2924, %v2972
      %2974 = vmatmul.bf16.gmra.mxu0 %v2269
      %v2975 = vpop.f32.mrf.mxu0
      %v2976 = vadd.f32 %v2927, %v2975
      %v2977 = vpop.f32.mrf.mxu0
      %v2978 = vadd.f32 %v2929, %v2977
      %2979 = vmatmul.bf16.gmra.mxu0 %v2272
      %v2980 = vpop.f32.mrf.mxu0
      %v2981 = vadd.f32 %v2932, %v2980
      %v2982 = vpop.f32.mrf.mxu0
      %v2983 = vadd.f32 %v2934, %v2982
      %2984 = vdwg.mxu0
      %v2985 = vadd.f32 %v2629, %v2946
      %v2986 = vadd.f32 %v2630, %v2948
      %v2987 = vadd.f32 %v2631, %v2951
      %v2988 = vadd.f32 %v2632, %v2953
      %v2989 = vadd.f32 %v2633, %v2956
      %v2990 = vadd.f32 %v2634, %v2958
      %v2991 = vadd.f32 %v2635, %v2961
      %v2992 = vadd.f32 %v2636, %v2963
      %v2993 = vadd.f32 %v2637, %v2966
      %v2994 = vadd.f32 %v2638, %v2968
      %v2995 = vadd.f32 %v2639, %v2971
      %v2996 = vadd.f32 %v2640, %v2973
      %v2997 = vadd.f32 %v2641, %v2976
      %v2998 = vadd.f32 %v2642, %v2978
      %v2999 = vadd.f32 %v2643, %v2981
      %v3000 = vadd.f32 %v2644, %v2983
      %s3001 = scalar_lea.vmem %s3, 384
      %v3002 = vld [vmem:[%s3001] sm:$0xf]
      %v3003 = vld [vmem:[%s3001 + $0x4] sm:$0xf]
      %v3004 = vld [vmem:[%s3001 + $0x8] sm:$0xf]
      %v3005 = vld [vmem:[%s3001 + $0xc] sm:$0xf]
      %v3006 = vld [vmem:[%s3001 + $0x10] sm:$0xf]
      %v3007 = vld [vmem:[%s3001 + $0x14] sm:$0xf]
      %v3008 = vld [vmem:[%s3001 + $0x18] sm:$0xf]
      %v3009 = vld [vmem:[%s3001 + $0x1c] sm:$0xf]
      %v3010 = vld [vmem:[%s3001 + $0x20] sm:$0xf]
      %v3011 = vld [vmem:[%s3001 + $0x24] sm:$0xf]
      %v3012 = vld [vmem:[%s3001 + $0x28] sm:$0xf]
      %v3013 = vld [vmem:[%s3001 + $0x2c] sm:$0xf]
      %v3014 = vld [vmem:[%s3001 + $0x30] sm:$0xf]
      %v3015 = vld [vmem:[%s3001 + $0x34] sm:$0xf]
      %v3016 = vld [vmem:[%s3001 + $0x38] sm:$0xf]
      %v3017 = vld [vmem:[%s3001 + $0x3c] sm:$0xf]
      %v3018 = vld [vmem:[%s3001 + $0x40] sm:$0xf]
      %v3019 = vld [vmem:[%s3001 + $0x44] sm:$0xf]
      %v3020 = vld [vmem:[%s3001 + $0x48] sm:$0xf]
      %v3021 = vld [vmem:[%s3001 + $0x4c] sm:$0xf]
      %v3022 = vld [vmem:[%s3001 + $0x50] sm:$0xf]
      %v3023 = vld [vmem:[%s3001 + $0x54] sm:$0xf]
      %v3024 = vld [vmem:[%s3001 + $0x58] sm:$0xf]
      %v3025 = vld [vmem:[%s3001 + $0x5c] sm:$0xf]
      %v3026 = vld [vmem:[%s3001 + $0x60] sm:$0xf]
      %v3027 = vld [vmem:[%s3001 + $0x64] sm:$0xf]
      %v3028 = vld [vmem:[%s3001 + $0x68] sm:$0xf]
      %v3029 = vld [vmem:[%s3001 + $0x6c] sm:$0xf]
      %v3030 = vld [vmem:[%s3001 + $0x70] sm:$0xf]
      %v3031 = vld [vmem:[%s3001 + $0x74] sm:$0xf]
      %v3032 = vld [vmem:[%s3001 + $0x78] sm:$0xf]
      %v3033 = vld [vmem:[%s3001 + $0x7c] sm:$0xf]
      %v3034 = vld [vmem:[%s3001 + $0x80] sm:$0xf]
      %v3035 = vld [vmem:[%s3001 + $0x84] sm:$0xf]
      %v3036 = vld [vmem:[%s3001 + $0x88] sm:$0xf]
      %v3037 = vld [vmem:[%s3001 + $0x8c] sm:$0xf]
      %v3038 = vld [vmem:[%s3001 + $0x90] sm:$0xf]
      %v3039 = vld [vmem:[%s3001 + $0x94] sm:$0xf]
      %v3040 = vld [vmem:[%s3001 + $0x98] sm:$0xf]
      %v3041 = vld [vmem:[%s3001 + $0x9c] sm:$0xf]
      %v3042 = vld [vmem:[%s3001 + $0xa0] sm:$0xf]
      %v3043 = vld [vmem:[%s3001 + $0xa4] sm:$0xf]
      %v3044 = vld [vmem:[%s3001 + $0xa8] sm:$0xf]
      %v3045 = vld [vmem:[%s3001 + $0xac] sm:$0xf]
      %v3046 = vld [vmem:[%s3001 + $0xb0] sm:$0xf]
      %v3047 = vld [vmem:[%s3001 + $0xb4] sm:$0xf]
      %v3048 = vld [vmem:[%s3001 + $0xb8] sm:$0xf]
      %v3049 = vld [vmem:[%s3001 + $0xbc] sm:$0xf]
      %v3098 = vunpack.c.l.b16 %v3002
      %v3099 = vunpack.c.l.b16 %v3003
      %v3100 = vunpack.c.l.b16 %v3004
      %v3101 = vunpack.c.l.b16 %v3005
      %v3102 = vunpack.c.l.b16 %v3006
      %v3103 = vunpack.c.l.b16 %v3007
      %v3104 = vunpack.c.l.b16 %v3008
      %v3105 = vunpack.c.l.b16 %v3009
      %v3106 = vunpack.c.l.b16 %v3010
      %v3107 = vunpack.c.l.b16 %v3011
      %v3108 = vunpack.c.l.b16 %v3012
      %v3109 = vunpack.c.l.b16 %v3013
      %v3110 = vunpack.c.l.b16 %v3014
      %v3111 = vunpack.c.l.b16 %v3015
      %v3112 = vunpack.c.l.b16 %v3016
      %v3113 = vunpack.c.l.b16 %v3017
      %v3114 = vunpack.c.l.b16 %v3018
      %v3115 = vunpack.c.l.b16 %v3019
      %v3116 = vunpack.c.l.b16 %v3020
      %v3117 = vunpack.c.l.b16 %v3021
      %v3118 = vunpack.c.l.b16 %v3022
      %v3119 = vunpack.c.l.b16 %v3023
      %v3120 = vunpack.c.l.b16 %v3024
      %v3121 = vunpack.c.l.b16 %v3025
      %v3122 = vunpack.c.l.b16 %v3026
      %v3123 = vunpack.c.l.b16 %v3027
      %v3124 = vunpack.c.l.b16 %v3028
      %v3125 = vunpack.c.l.b16 %v3029
      %v3126 = vunpack.c.l.b16 %v3030
      %v3127 = vunpack.c.l.b16 %v3031
      %v3128 = vunpack.c.l.b16 %v3032
      %v3129 = vunpack.c.l.b16 %v3033
      %v3130 = vunpack.c.l.b16 %v3034
      %v3131 = vunpack.c.l.b16 %v3035
      %v3132 = vunpack.c.l.b16 %v3036
      %v3133 = vunpack.c.l.b16 %v3037
      %v3134 = vunpack.c.l.b16 %v3038
      %v3135 = vunpack.c.l.b16 %v3039
      %v3136 = vunpack.c.l.b16 %v3040
      %v3137 = vunpack.c.l.b16 %v3041
      %v3138 = vunpack.c.l.b16 %v3042
      %v3139 = vunpack.c.l.b16 %v3043
      %v3140 = vunpack.c.l.b16 %v3044
      %v3141 = vunpack.c.l.b16 %v3045
      %v3142 = vunpack.c.l.b16 %v3046
      %v3143 = vunpack.c.l.b16 %v3047
      %v3144 = vunpack.c.l.b16 %v3048
      %v3145 = vunpack.c.l.b16 %v3049
      %v3146 = vpack.c.b16 %v3099, %v3098
      %v3147 = vpack.c.b16 %v3101, %v3100
      %v3148 = vpack.c.b16 %v3103, %v3102
      %v3149 = vpack.c.b16 %v3105, %v3104
      %v3150 = vpack.c.b16 %v3107, %v3106
      %v3151 = vpack.c.b16 %v3109, %v3108
      %v3152 = vpack.c.b16 %v3111, %v3110
      %v3153 = vpack.c.b16 %v3113, %v3112
      %v3154 = vpack.c.b16 %v3115, %v3114
      %v3155 = vpack.c.b16 %v3117, %v3116
      %v3156 = vpack.c.b16 %v3119, %v3118
      %v3157 = vpack.c.b16 %v3121, %v3120
      %v3158 = vpack.c.b16 %v3123, %v3122
      %v3159 = vpack.c.b16 %v3125, %v3124
      %v3160 = vpack.c.b16 %v3127, %v3126
      %v3161 = vpack.c.b16 %v3129, %v3128
      %v3162 = vpack.c.b16 %v3131, %v3130
      %v3163 = vpack.c.b16 %v3133, %v3132
      %v3164 = vpack.c.b16 %v3135, %v3134
      %v3165 = vpack.c.b16 %v3137, %v3136
      %v3166 = vpack.c.b16 %v3139, %v3138
      %v3167 = vpack.c.b16 %v3141, %v3140
      %v3168 = vpack.c.b16 %v3143, %v3142
      %v3169 = vpack.c.b16 %v3145, %v3144
      %3194 = vmatpush.bf16.msra.mxu0 %v3153
      %3195 = vmatpush.bf16.msra.mxu0 %v3152
      %3196 = vmatpush.bf16.msra.mxu0 %v3151
      %3197 = vmatpush.bf16.msra.mxu0 %v3150
      %3198 = vmatpush.bf16.msra.mxu0 %v3149
      %3199 = vmatpush.bf16.msra.mxu0 %v3148
      %3200 = vmatpush.bf16.msra.mxu0 %v3147
      %3201 = vmatpush.bf16.msra.mxu0 %v3146
      %3202 = vmatmul.bf16.gmra.mxu0 %v2068
      %v3203 = vpop.f32.mrf.mxu0
      %v3204 = vadd.f32 0.0, %v3203
      %v3205 = vpop.f32.mrf.mxu0
      %v3206 = vadd.f32 0.0, %v3205
      %3207 = vmatmul.bf16.gmra.mxu0 %v2069
      %v3208 = vpop.f32.mrf.mxu0
      %v3209 = vadd.f32 0.0, %v3208
      %v3210 = vpop.f32.mrf.mxu0
      %v3211 = vadd.f32 0.0, %v3210
      %3212 = vmatmul.bf16.gmra.mxu0 %v2070
      %v3213 = vpop.f32.mrf.mxu0
      %v3214 = vadd.f32 0.0, %v3213
      %v3215 = vpop.f32.mrf.mxu0
      %v3216 = vadd.f32 0.0, %v3215
      %3217 = vmatmul.bf16.gmra.mxu0 %v2071
      %v3218 = vpop.f32.mrf.mxu0
      %v3219 = vadd.f32 0.0, %v3218
      %v3220 = vpop.f32.mrf.mxu0
      %v3221 = vadd.f32 0.0, %v3220
      %3222 = vmatmul.bf16.gmra.mxu0 %v2072
      %v3223 = vpop.f32.mrf.mxu0
      %v3224 = vadd.f32 0.0, %v3223
      %v3225 = vpop.f32.mrf.mxu0
      %v3226 = vadd.f32 0.0, %v3225
      %3227 = vmatmul.bf16.gmra.mxu0 %v2073
      %v3228 = vpop.f32.mrf.mxu0
      %v3229 = vadd.f32 0.0, %v3228
      %v3230 = vpop.f32.mrf.mxu0
      %v3231 = vadd.f32 0.0, %v3230
      %3232 = vmatmul.bf16.gmra.mxu0 %v2074
      %v3233 = vpop.f32.mrf.mxu0
      %v3234 = vadd.f32 0.0, %v3233
      %v3235 = vpop.f32.mrf.mxu0
      %v3236 = vadd.f32 0.0, %v3235
      %3237 = vmatmul.bf16.gmra.mxu0 %v2075
      %v3238 = vpop.f32.mrf.mxu0
      %v3239 = vadd.f32 0.0, %v3238
      %v3240 = vpop.f32.mrf.mxu0
      %v3241 = vadd.f32 0.0, %v3240
      %3242 = vdwg.mxu0
      %3243 = vmatpush.bf16.msra.mxu0 %v3161
      %3244 = vmatpush.bf16.msra.mxu0 %v3160
      %3245 = vmatpush.bf16.msra.mxu0 %v3159
      %3246 = vmatpush.bf16.msra.mxu0 %v3158
      %3247 = vmatpush.bf16.msra.mxu0 %v3157
      %3248 = vmatpush.bf16.msra.mxu0 %v3156
      %3249 = vmatpush.bf16.msra.mxu0 %v3155
      %3250 = vmatpush.bf16.msra.mxu0 %v3154
      %3251 = vmatmul.bf16.gmra.mxu0 %v2151
      %v3252 = vpop.f32.mrf.mxu0
      %v3253 = vadd.f32 %v3204, %v3252
      %v3254 = vpop.f32.mrf.mxu0
      %v3255 = vadd.f32 %v3206, %v3254
      %3256 = vmatmul.bf16.gmra.mxu0 %v2163
      %v3257 = vpop.f32.mrf.mxu0
      %v3258 = vadd.f32 %v3209, %v3257
      %v3259 = vpop.f32.mrf.mxu0
      %v3260 = vadd.f32 %v3211, %v3259
      %3261 = vmatmul.bf16.gmra.mxu0 %v2175
      %v3262 = vpop.f32.mrf.mxu0
      %v3263 = vadd.f32 %v3214, %v3262
      %v3264 = vpop.f32.mrf.mxu0
      %v3265 = vadd.f32 %v3216, %v3264
      %3266 = vmatmul.bf16.gmra.mxu0 %v2187
      %v3267 = vpop.f32.mrf.mxu0
      %v3268 = vadd.f32 %v3219, %v3267
      %v3269 = vpop.f32.mrf.mxu0
      %v3270 = vadd.f32 %v3221, %v3269
      %3271 = vmatmul.bf16.gmra.mxu0 %v2199
      %v3272 = vpop.f32.mrf.mxu0
      %v3273 = vadd.f32 %v3224, %v3272
      %v3274 = vpop.f32.mrf.mxu0
      %v3275 = vadd.f32 %v3226, %v3274
      %3276 = vmatmul.bf16.gmra.mxu0 %v2211
      %v3277 = vpop.f32.mrf.mxu0
      %v3278 = vadd.f32 %v3229, %v3277
      %v3279 = vpop.f32.mrf.mxu0
      %v3280 = vadd.f32 %v3231, %v3279
      %3281 = vmatmul.bf16.gmra.mxu0 %v2223
      %v3282 = vpop.f32.mrf.mxu0
      %v3283 = vadd.f32 %v3234, %v3282
      %v3284 = vpop.f32.mrf.mxu0
      %v3285 = vadd.f32 %v3236, %v3284
      %3286 = vmatmul.bf16.gmra.mxu0 %v2235
      %v3287 = vpop.f32.mrf.mxu0
      %v3288 = vadd.f32 %v3239, %v3287
      %v3289 = vpop.f32.mrf.mxu0
      %v3290 = vadd.f32 %v3241, %v3289
      %3291 = vdwg.mxu0
      %3292 = vmatpush.bf16.msra.mxu0 %v3169
      %3293 = vmatpush.bf16.msra.mxu0 %v3168
      %3294 = vmatpush.bf16.msra.mxu0 %v3167
      %3295 = vmatpush.bf16.msra.mxu0 %v3166
      %3296 = vmatpush.bf16.msra.mxu0 %v3165
      %3297 = vmatpush.bf16.msra.mxu0 %v3164
      %3298 = vmatpush.bf16.msra.mxu0 %v3163
      %3299 = vmatpush.bf16.msra.mxu0 %v3162
      %3300 = vmatmul.bf16.gmra.mxu0 %v2254
      %v3301 = vpop.f32.mrf.mxu0
      %v3302 = vadd.f32 %v3253, %v3301
      %v3303 = vpop.f32.mrf.mxu0
      %v3304 = vadd.f32 %v3255, %v3303
      %3305 = vmatmul.bf16.gmra.mxu0 %v2257
      %v3306 = vpop.f32.mrf.mxu0
      %v3307 = vadd.f32 %v3258, %v3306
      %v3308 = vpop.f32.mrf.mxu0
      %v3309 = vadd.f32 %v3260, %v3308
      %3310 = vmatmul.bf16.gmra.mxu0 %v2260
      %v3311 = vpop.f32.mrf.mxu0
      %v3312 = vadd.f32 %v3263, %v3311
      %v3313 = vpop.f32.mrf.mxu0
      %v3314 = vadd.f32 %v3265, %v3313
      %3315 = vmatmul.bf16.gmra.mxu0 %v2263
      %v3316 = vpop.f32.mrf.mxu0
      %v3317 = vadd.f32 %v3268, %v3316
      %v3318 = vpop.f32.mrf.mxu0
      %v3319 = vadd.f32 %v3270, %v3318
      %3320 = vmatmul.bf16.gmra.mxu0 %v2266
      %v3321 = vpop.f32.mrf.mxu0
      %v3322 = vadd.f32 %v3273, %v3321
      %v3323 = vpop.f32.mrf.mxu0
      %v3324 = vadd.f32 %v3275, %v3323
      %3325 = vmatmul.bf16.gmra.mxu0 %v2269
      %v3326 = vpop.f32.mrf.mxu0
      %v3327 = vadd.f32 %v3278, %v3326
      %v3328 = vpop.f32.mrf.mxu0
      %v3329 = vadd.f32 %v3280, %v3328
      %3330 = vmatmul.bf16.gmra.mxu0 %v2272
      %v3331 = vpop.f32.mrf.mxu0
      %v3332 = vadd.f32 %v3283, %v3331
      %v3333 = vpop.f32.mrf.mxu0
      %v3334 = vadd.f32 %v3285, %v3333
      %3335 = vmatmul.bf16.gmra.mxu0 %v2275
      %v3336 = vpop.f32.mrf.mxu0
      %v3337 = vadd.f32 %v3288, %v3336
      %v3338 = vpop.f32.mrf.mxu0
      %v3339 = vadd.f32 %v3290, %v3338
      %3340 = vdwg.mxu0
      %v3341 = vadd.f32 %v2985, %v3302
      %v3342 = vadd.f32 %v2986, %v3304
      %v3343 = vadd.f32 %v2987, %v3307
      %v3344 = vadd.f32 %v2988, %v3309
      %v3345 = vadd.f32 %v2989, %v3312
      %v3346 = vadd.f32 %v2990, %v3314
      %v3347 = vadd.f32 %v2991, %v3317
      %v3348 = vadd.f32 %v2992, %v3319
      %v3349 = vadd.f32 %v2993, %v3322
      %v3350 = vadd.f32 %v2994, %v3324
      %v3351 = vadd.f32 %v2995, %v3327
      %v3352 = vadd.f32 %v2996, %v3329
      %v3353 = vadd.f32 %v2997, %v3332
      %v3354 = vadd.f32 %v2998, %v3334
      %v3355 = vadd.f32 %v2999, %v3337
      %v3356 = vadd.f32 %v3000, %v3339
      %vm3381 = vcmask 1046528
      %v3382 = vrot.slane %v270, 1
      %v3383 = vrot.slane %v271, 1
      %v3384 = vsel %vm3381, %v3382, %v3383
      %v3385 = vrot.slane %v272, 1
      %v3386 = vsel %vm3381, %v3383, %v3385
      %v3387 = vrot.slane %v273, 1
      %v3388 = vrot.slane %v274, 1
      %v3389 = vsel %vm3381, %v3387, %v3388
      %v3390 = vrot.slane %v275, 1
      %v3391 = vsel %vm3381, %v3388, %v3390
      %v3392 = vrot.slane %v276, 1
      %v3393 = vrot.slane %v277, 1
      %v3394 = vsel %vm3381, %v3392, %v3393
      %v3395 = vrot.slane %v278, 1
      %v3396 = vsel %vm3381, %v3393, %v3395
      %v3397 = vrot.slane %v279, 1
      %v3398 = vrot.slane %v280, 1
      %v3399 = vsel %vm3381, %v3397, %v3398
      %v3400 = vrot.slane %v281, 1
      %v3401 = vsel %vm3381, %v3398, %v3400
      %v3402 = vrot.slane %v282, 1
      %v3403 = vrot.slane %v283, 1
      %v3404 = vsel %vm3381, %v3402, %v3403
      %v3405 = vrot.slane %v284, 1
      %v3406 = vsel %vm3381, %v3403, %v3405
      %v3407 = vrot.slane %v285, 1
      %v3408 = vrot.slane %v286, 1
      %v3409 = vsel %vm3381, %v3407, %v3408
      %v3410 = vrot.slane %v287, 1
      %v3411 = vsel %vm3381, %v3408, %v3410
      %v3412 = vrot.slane %v288, 1
      %v3413 = vrot.slane %v289, 1
      %v3414 = vsel %vm3381, %v3412, %v3413
      %v3415 = vrot.slane %v290, 1
      %v3416 = vsel %vm3381, %v3413, %v3415
      %v3417 = vrot.slane %v291, 1
      %v3418 = vrot.slane %v292, 1
      %v3419 = vsel %vm3381, %v3417, %v3418
      %v3420 = vrot.slane %v293, 1
      %v3421 = vsel %vm3381, %v3418, %v3420
      %v3438 = vadd.f32 %v3384, %v3341
      %v3439 = vadd.f32 %v3386, %v3342
      %v3440 = vadd.f32 %v3389, %v3343
      %v3441 = vadd.f32 %v3391, %v3344
      %v3442 = vadd.f32 %v3394, %v3345
      %v3443 = vadd.f32 %v3396, %v3346
      %v3444 = vadd.f32 %v3399, %v3347
      %v3445 = vadd.f32 %v3401, %v3348
      %v3446 = vadd.f32 %v3404, %v3349
      %v3447 = vadd.f32 %v3406, %v3350
      %v3448 = vadd.f32 %v3409, %v3351
      %v3449 = vadd.f32 %v3411, %v3352
      %v3450 = vadd.f32 %v3414, %v3353
      %v3451 = vadd.f32 %v3416, %v3354
      %v3452 = vadd.f32 %v3419, %v3355
      %v3453 = vadd.f32 %v3421, %v3356
      %3454 = vst [vmem:[%s262] sm:$0xff] %v3438
      %3455 = vst [vmem:[%s262 + $0x8] sm:$0xff] %v3439
      %3456 = vst [vmem:[%s262 + $0x10] sm:$0xff] %v3440
      %3457 = vst [vmem:[%s262 + $0x18] sm:$0xff] %v3441
      %3458 = vst [vmem:[%s262 + $0x20] sm:$0xff] %v3442
      %3459 = vst [vmem:[%s262 + $0x28] sm:$0xff] %v3443
      %3460 = vst [vmem:[%s262 + $0x30] sm:$0xff] %v3444
      %3461 = vst [vmem:[%s262 + $0x38] sm:$0xff] %v3445
      %3462 = vst [vmem:[%s262 + $0x40] sm:$0xff] %v3446
      %3463 = vst [vmem:[%s262 + $0x48] sm:$0xff] %v3447
      %3464 = vst [vmem:[%s262 + $0x50] sm:$0xff] %v3448
      %3465 = vst [vmem:[%s262 + $0x58] sm:$0xff] %v3449
      %3466 = vst [vmem:[%s262 + $0x60] sm:$0xff] %v3450
      %3467 = vst [vmem:[%s262 + $0x68] sm:$0xff] %v3451
      %3468 = vst [vmem:[%s262 + $0x70] sm:$0xff] %v3452
      %3469 = vst [vmem:[%s262 + $0x78] sm:$0xff] %v3453
      %s3470 = smul.u32 8, %s21
      %p3471 = scmp.lt.s32.totalorder %s20, 1
      %s3472 = scalar_select %p3471, %s20, 1
      %p3473 = scmp.lt.s32.totalorder %s3470, 15
      %s3474 = scalar_select %p3473, %s3470, 15
      %s3475 = smul.addr %s3474, 2
      %s3476 = smul.addr %s3472, 32
      %s3477 = sadd.s32 %s3475, %s3476
      %s3478 = smul.addr %s3477, 8
      %s3479 = scalar_lea.vmem %s5, %s3478
      // Predicated region
      $region41: #{resnet_block.1} parent=39 // pred_check
        %p3480 = pneg %p162
      $region42: #{resnet_block.1} parent=39 // pred_check_branch
        %3482 = sbr.rel (%p3480) target = $region44
      $region43: #{resnet_block.1} parent=39 // pred_region
        %s3483 = smul.u32 8, %s21
      $region44: #{resnet_block.1} parent=39 // pred_fallthru
        _
    $region40: #{resnet_block.1} parent=5 // pred_fallthru
      _
    %p3484 = scmp.le.s32.totalorder 2, %s11
    // Predicated region
    $region45: #{resnet_block.1} parent=5 // pred_check
      %p3485 = pneg %p3484
    $region46: #{resnet_block.1} parent=5 // pred_check_branch
      %3487 = sbr.rel (%p3485) target = $region48
    $region47: #{resnet_block.1} parent=5 // pred_region
      %s3488 = ssub.s32 %s11, 2
      // Predicated region
      $region49: #{resnet_block.1} parent=47 // pred_check
        %p3489 = pneg %p168
      $region50: #{resnet_block.1} parent=47 // pred_check_branch
        %3491 = sbr.rel (%p3489) target = $region52
      $region51: #{resnet_block.1} parent=47 // pred_region
        %s3492 = smul.u32 8, %s23
        %p3493 = scmp.lt.s32.totalorder %s22, 1
        %s3494 = scalar_select %p3493, %s22, 1
        %p3495 = scmp.lt.s32.totalorder %s3492, 15
        %s3496 = scalar_select %p3495, %s3492, 15
        %s3497 = smul.addr %s3496, 2
        %s3498 = smul.addr %s3494, 32
        %s3499 = sadd.s32 %s3497, %s3498
        %s3500 = smul.addr %s3499, 8
        %s3501 = scalar_lea.vmem %s5, %s3500
      $region52: #{resnet_block.1} parent=47 // pred_fallthru
        _
    $region48: #{resnet_block.1} parent=5 // pred_fallthru
      _
  $region6: #{resnet_block.1} parent=0 // loop_footer
    %s15 = sadd.s32 1, %s11
  $region7: #{resnet_block.1} parent=0 // loop_footer_branch
    %10 = sbr.rel target = $region3
  $region8: #{resnet_block.1} parent=0 // loop_exit
    _

</llo_original>
